<compile_context>
chip_gen: v5e
topology: v5e:2x2
jax: 0.10.0
libtpu: 0.0.40
codegen_flags: <defaults>
</compile_context>

<pallas_src>
import jax
import jax.numpy as jnp
from jax import lax
from jax.experimental import pallas as pl
from jax.experimental.pallas import tpu as pltpu


def _elu(v):
    return jnp.where(v > 0, v, jnp.exp(v) - 1.0)


def _batchnorm(v, gamma, beta, eps=1e-5):
    # training-mode batch statistics (biased variance), as BatchNorm1d.train()
    mean = jnp.mean(v, axis=0, keepdims=True)
    var = jnp.mean((v - mean) ** 2, axis=0, keepdims=True)
    return (v - mean) * lax.rsqrt(var + eps) * gamma + beta


# ---------------------------------------------------------------------------
# One fused kernel for the whole forward pass
# ---------------------------------------------------------------------------
def make_fused_kernel(layout, n_convs, n_atts, heads, n_post):
    def kernel(x_ref, tgt1h_ref, src1h_ref, ea_ref, pool_ref, slab_ref, out_ref):
        slab = slab_ref[...]                                  # one f32 weight slab

        def W(name):                                          # static slice
            r, nr, nc = layout[name]
            return slab[r:r + nr, :nc]

        tgt1h = tgt1h_ref[...]                                # (E, N) bf16
        src1h = src1h_ref[...]                                # (E, N) bf16
        ea = ea_ref[...]                                      # (E, EF) f32
        mask = (ea[:, 0:1] < 8.0).astype(jnp.float32)         # shared by all layers

        def gather(onehot, v):                                # (E, C) = onehot @ v
            return jnp.dot(onehot, v.astype(jnp.bfloat16),
                           preferred_element_type=jnp.float32)

        def scatter_src(m):                                   # (N, C), contract over E
            return lax.dot_general(src1h, m.astype(jnp.bfloat16),
                                   dimension_numbers=(((0,), (0,)), ((), ())),
                                   preferred_element_type=jnp.float32)

        def edge_proj(w):                                     # Linear(EF -> C) on edge_attr
            if ea.shape[1] == 1:
                return ea * w                                 # EF==1: VPU broadcast, no MXU
            return jnp.dot(ea, w, preferred_element_type=jnp.float32)

        # ------------------- SimpleGraphConv stack (+BN) -------------------
        h = x_ref[...]                                        # (N, Cin) f32
        for i in range(n_convs):
            edge = _elu(edge_proj(W(f'conv{i}_we')) + W(f'conv{i}_be'))   # (E, C)
            xj = gather(tgt1h, h)                                         # x[tgt]
            aggr = scatter_src(edge * xj * mask)                          # (N, C)
            hu = jnp.dot(h + aggr, W(f'conv{i}_wu'),
                         preferred_element_type=jnp.float32) + W(f'conv{i}_bu')
            h = _batchnorm(hu, W(f'conv{i}_g'), W(f'conv{i}_b'))

        # -------- multi-head attention layers (heads fused along lanes) ----
        for i in range(n_atts):
            hc = layout[f'att{i}_wnj'][2]                     # heads * per-head C
            ni = gather(src1h, h)                             # x[src]   (E, in_w)
            nj = gather(tgt1h, h)                             # x[tgt]
            # fused ni-side projection: [Wni+Wd | Wq * c^-0.5]
            fni_q = jnp.dot(ni, W(f'att{i}_wniq'),
                            preferred_element_type=jnp.float32)           # (E, 2*hc)
            f = _elu(fni_q[:, :hc]
                     + jnp.dot(nj, W(f'att{i}_wnj'),
                               preferred_element_type=jnp.float32)
                     + edge_proj(W(f'att{i}_wfe')) + W(f'att{i}_bf')) * mask
            q = fni_q[:, hc:]
            k = jnp.dot(f, W(f'att{i}_wk'), preferred_element_type=jnp.float32)
            # per-head Linear(C->1, weight folded into head-sum) + Tanh,
            # broadcast across that head's lanes (kept lane-dense).
            a = jnp.tanh(jnp.dot(q * k, W(f'att{i}_hsum'),
                                 preferred_element_type=jnp.float32))     # (E, hc)
            a_src = gather(src1h, scatter_src(a))             # scatter-sum then gather
            z = jnp.exp(a - a_src) * f                        # (E, hc)
            aggr = scatter_src(z)                             # (N, hc)
            # delayed head replication: only tile h for the residual of layer 0
            h_res = jnp.concatenate([h] * heads, axis=1) if i == 0 else h
            hu = jnp.dot(h_res + aggr, W(f'att{i}_wu'),
                         preferred_element_type=jnp.float32) + W(f'att{i}_bu')
            h = _batchnorm(hu, W(f'att{i}_g'), W(f'att{i}_b'))

        # ---------------- global_mean_pool + post MLP -----------------------
        hp = jnp.dot(pool_ref[...], h, preferred_element_type=jnp.float32)  # (G, H)
        # dropout_rate = 0.0 -> no-op
        for i in range(n_post):
            hp = jnp.dot(hp, W(f'post{i}_w'),
                         preferred_element_type=jnp.float32) + W(f'post{i}_b')
            hp = jnp.where(hp >= 0.0, hp, W(f'post{i}_p') * hp)   # PReLU (1 param)
        out_ref[...] = jnp.dot(hp, W('out_w'),
                               preferred_element_type=jnp.float32) + W('out_b')
    return kernel


# ---------------------------------------------------------------------------
# Weight-slab packing (one DMA instead of ~40 tiny ones)
# ---------------------------------------------------------------------------
def _pack_slab(entries, lane_pad=128, row_pad=8):
    width = max(int(a.shape[1]) for _, a in entries)
    width = ((width + lane_pad - 1) // lane_pad) * lane_pad
    layout, rows, r = {}, [], 0
    for name, a in entries:
        a = jnp.asarray(a, jnp.float32)
        nr, nc = int(a.shape[0]), int(a.shape[1])
        layout[name] = (r, nr, nc)
        nr_pad = ((nr + row_pad - 1) // row_pad) * row_pad     # 8-aligned row starts
        a = jnp.pad(a, ((0, nr_pad - nr), (0, width - nc)))
        rows.append(a)
        r += nr_pad
    return jnp.concatenate(rows, axis=0), layout


# ---------------------------------------------------------------------------
# Wrapper
# ---------------------------------------------------------------------------
def three_sections_gnn_forward(x, edge_index, edge_attr, batch, num_graphs, params):
    n = x.shape[0]
    # add_self_loops(fill_value=0) once (every layer adds them to the same base set)
    loop = jnp.arange(n, dtype=edge_index.dtype)
    edge_index = jnp.concatenate([edge_index, jnp.stack([loop, loop])], axis=1)
    edge_attr = jnp.concatenate(
        [edge_attr, jnp.zeros((n, edge_attr.shape[1]), edge_attr.dtype)], axis=0)
    src, tgt = edge_index[0], edge_index[1]
    # bf16 one-hot gather/scatter operands (0/1 exact; half the HBM/VMEM bytes)
    src1h = jax.nn.one_hot(src, n, dtype=jnp.bfloat16)        # (E, N)
    tgt1h = jax.nn.one_hot(tgt, n, dtype=jnp.bfloat16)        # (E, N)
    g1h = jax.nn.one_hot(batch, num_graphs, dtype=jnp.float32)
    counts = jnp.sum(g1h, axis=0, keepdims=True)
    pool_mat = (g1h / jnp.maximum(counts, 1.0)).T             # (G, N), NaN-safe

    heads = params['heads']
    convs, atts, post = params['convs'], params['atts'], params['post']

    entries = []
    for i, p in enumerate(convs):
        entries += [(f'conv{i}_we', p['we_t']), (f'conv{i}_be', p['be']),
                    (f'conv{i}_wu', p['wu_t']), (f'conv{i}_bu', p['bu']),
                    (f'conv{i}_g', p['gamma']), (f'conv{i}_b', p['beta'])]
    for i, p in enumerate(atts):
        entries += [(f'att{i}_wniq', p['wniq']), (f'att{i}_wnj', p['wnj']),
                    (f'att{i}_wfe', p['wfe']), (f'att{i}_bf', p['bf']),
                    (f'att{i}_wk', p['wk']), (f'att{i}_hsum', p['hsum']),
                    (f'att{i}_wu', p['wu']), (f'att{i}_bu', p['bu']),
                    (f'att{i}_g', p['gamma']), (f'att{i}_b', p['beta'])]
    for i, lyr in enumerate(post['layers']):
        entries += [(f'post{i}_w', lyr['w_t']), (f'post{i}_b', lyr['b']),
                    (f'post{i}_p', lyr['prelu'])]
    entries += [('out_w', post['w_out_t']), ('out_b', post['b_out'])]
    slab, layout = _pack_slab(entries)

    g = pool_mat.shape[0]
    out_dim = post['w_out_t'].shape[1]
    kernel = make_fused_kernel(layout, len(convs), len(atts), heads,
                               len(post['layers']))

    inputs = [x.astype(jnp.float32), tgt1h, src1h,
              edge_attr.astype(jnp.float32), pool_mat, slab]

    # explicit VMEM residency + scoped-VMEM limit sized from the operands
    in_bytes = sum(int(a.size) * a.dtype.itemsize for a in inputs)
    e_tot = int(src1h.shape[0])
    feat_w = max(nc for (_, _, nc) in layout.values())
    vmem_limit = int(min(64 * 2 ** 20,
                         max(8 * 2 ** 20,
                             2 * in_bytes + 16 * e_tot * max(feat_w, n) * 4)))

    out = pl.pallas_call(
        kernel,
        out_shape=jax.ShapeDtypeStruct((g, out_dim), jnp.float32),
        in_specs=[pl.BlockSpec(memory_space=pltpu.MemorySpace.VMEM)] * len(inputs),
        out_specs=pl.BlockSpec(memory_space=pltpu.MemorySpace.VMEM),
        compiler_params=pltpu.CompilerParams(vmem_limit_bytes=vmem_limit),
    )(*inputs)
    # dropout_rate = 0.0 -> no-op; final .view(-1)
    return out.reshape(-1)


# ---------------------------------------------------------------------------
# Deterministic parameter init (synthetic, PyTorch-Linear-like uniform ranges)
# with the wrapper-side algebraic folds applied.
# ---------------------------------------------------------------------------
def _linear_init(key, in_f, out_f, bias=True):
    kw, kb = jax.random.split(key)
    bound = 1.0 / (in_f ** 0.5)
    w = jax.random.uniform(kw, (out_f, in_f), jnp.float32, -bound, bound)
    b = (jax.random.uniform(kb, (1, out_f), jnp.float32, -bound, bound)
         if bias else None)
    return w, b


def _block_diag(blocks):
    rows = sum(b.shape[0] for b in blocks)
    cols = sum(b.shape[1] for b in blocks)
    out = jnp.zeros((rows, cols), jnp.float32)
    r = c = 0
    for b in blocks:
        out = out.at[r:r + b.shape[0], c:c + b.shape[1]].set(b)
        r += b.shape[0]
        c += b.shape[1]
    return out


def init_params(key, f_in, dims, heads, edge_features, output_dim):
    keys = iter(jax.random.split(key, 256))
    params = {'heads': heads}
    trans = f_in

    convs = []
    for c_out in dims[0]:
        we, be = _linear_init(next(keys), edge_features, trans)
        wu, bu = _linear_init(next(keys), trans, c_out)
        convs.append(dict(we_t=we.T, be=be, wu_t=wu.T, bu=bu,
                          gamma=jnp.ones((1, c_out), jnp.float32),
                          beta=jnp.zeros((1, c_out), jnp.float32)))
        trans = c_out
    params['convs'] = convs

    atts = []
    for li, a_out in enumerate(dims[1]):
        c = trans
        first = (li == 0)
        scale = float(c) ** -0.5
        wni_l, wnj_l, wfe_l, bf_l = [], [], [], []
        wq_l, wk_l, hsum_l, wu_l, bu_l = [], [], [], [], []
        for _ in range(heads):
            wf, bfh = _linear_init(next(keys), 3 * c + edge_features, c)
            wqh, _ = _linear_init(next(keys), c, c, bias=False)
            wkh, _ = _linear_init(next(keys), c, c, bias=False)
            wah, _ = _linear_init(next(keys), c, 1, bias=False)     # (1, c)
            wuh, buh = _linear_init(next(keys), c, a_out)
            wni_t = wf[:, :c].T
            wnj_t = wf[:, c:2 * c].T
            wd_t = wf[:, 2 * c:3 * c].T
            wfe_t = wf[:, 3 * c:].T
            # fold delta = ni - nj into ni/nj weights
            wni_l.append(wni_t + wd_t)
            wnj_l.append(wnj_t - wd_t)
            wfe_l.append(wfe_t)
            bf_l.append(bfh)
            wq_l.append(wqh.T * scale)                              # fold qk scale
            wk_l.append(wkh.T)
            hsum_l.append(jnp.tile(wah.T, (1, c)))                  # fold wa into head-sum
            wu_l.append(wuh.T)
            bu_l.append(buh)
        if first:
            # delayed replication: first layer sees un-replicated (N, C) input,
            # so per-head input blocks are shared -> hstack instead of block-diag
            wni_all = jnp.concatenate(wni_l, axis=1)
            wnj_all = jnp.concatenate(wnj_l, axis=1)
            wq_all = jnp.concatenate(wq_l, axis=1)
        else:
            wni_all = _block_diag(wni_l)
            wnj_all = _block_diag(wnj_l)
            wq_all = _block_diag(wq_l)
        atts.append(dict(
            wniq=jnp.concatenate([wni_all, wq_all], axis=1),        # fused ni-side matmul
            wnj=wnj_all,
            wfe=jnp.concatenate(wfe_l, axis=1),
            bf=jnp.concatenate(bf_l, axis=1),
            wk=_block_diag(wk_l),
            hsum=_block_diag(hsum_l),
            wu=_block_diag(wu_l),
            bu=jnp.concatenate(bu_l, axis=1),
            gamma=jnp.ones((1, heads * a_out), jnp.float32),
            beta=jnp.zeros((1, heads * a_out), jnp.float32)))
        trans = a_out
    params['atts'] = atts
    if len(dims[1]) != 0:
        trans = trans * heads

    mlps = []
    for hdim in dims[2]:
        w, b = _linear_init(next(keys), trans, hdim)
        mlps.append(dict(w_t=w.T, b=b,
                         prelu=jnp.full((1, 1), 0.25, jnp.float32)))
        trans = hdim
    w, b = _linear_init(next(keys), trans, output_dim)
    params['post'] = dict(layers=mlps, w_out_t=w.T, b_out=b)
    return params


if __name__ == "__main__":
    key = jax.random.PRNGKey(0)
    ks = iter(jax.random.split(key, 16))

    N, F_IN, EF = 16, 8, 1          # data.num_features = 8, edge_features = 1
    E = 32
    HEADS = 3
    DIMS = [[16, 16, 16], [16], [16]]
    OUTPUT_DIM = 3                  # len(data[0].y)
    NUM_GRAPHS = 2

    x = jax.random.normal(next(ks), (N, F_IN), jnp.float32)
    src = jax.random.randint(next(ks), (E,), 0, N)
    tgt = jax.random.randint(next(ks), (E,), 0, N)
    edge_index = jnp.stack([src, tgt]).astype(jnp.int32)       # (2, E)
    edge_attr = jax.random.uniform(next(ks), (E, EF), jnp.float32, 0.0, 12.0)
    batch = jnp.concatenate([jnp.zeros(N // 2, jnp.int32),
                             jnp.ones(N // 2, jnp.int32)])     # (N,)

    params = init_params(next(ks), F_IN, DIMS, HEADS, EF, OUTPUT_DIM)

    out = three_sections_gnn_forward(x, edge_index, edge_attr, batch,
                                     NUM_GRAPHS, params)
    out = jax.block_until_ready(out)

    assert out.shape == (NUM_GRAPHS * OUTPUT_DIM,), out.shape
    assert bool(jnp.all(jnp.isfinite(out)))
    print("KERNEL_OK")
</pallas_src>

<mosaic_0001>
module attributes {stable_mosaic.version = 11 : i64} {
  func.func @kernel(%arg0: memref<16x8xf32, #tpu.memory_space<vmem>>, %arg1: memref<48x16xbf16, #tpu.memory_space<vmem>>, %arg2: memref<48x16xbf16, #tpu.memory_space<vmem>>, %arg3: memref<48x1xf32, #tpu.memory_space<vmem>>, %arg4: memref<2x16xf32, #tpu.memory_space<vmem>>, %arg5: memref<464x128xf32, #tpu.memory_space<vmem>>, %arg6: memref<2x3xf32, #tpu.memory_space<vmem>>) attributes {dimension_semantics = [], scalar_prefetch = 0 : i64, scratch_operands = 0 : i64, tpu.core_type = #tpu.core_type<tc>} {
    %c0 = arith.constant 0 : index
    %c0_0 = arith.constant 0 : index
    %0 = vector.load %arg5[%c0, %c0_0] : memref<464x128xf32, #tpu.memory_space<vmem>>, vector<464x128xf32>
    %c0_1 = arith.constant 0 : index
    %c0_2 = arith.constant 0 : index
    %1 = vector.load %arg1[%c0_1, %c0_2] : memref<48x16xbf16, #tpu.memory_space<vmem>>, vector<48x16xbf16>
    %c0_3 = arith.constant 0 : index
    %c0_4 = arith.constant 0 : index
    %2 = vector.load %arg2[%c0_3, %c0_4] : memref<48x16xbf16, #tpu.memory_space<vmem>>, vector<48x16xbf16>
    %c0_5 = arith.constant 0 : index
    %c0_6 = arith.constant 0 : index
    %3 = vector.load %arg3[%c0_5, %c0_6] : memref<48x1xf32, #tpu.memory_space<vmem>>, vector<48x1xf32>
    %cst = arith.constant 8.000000e+00 : f32
    %4 = vector.broadcast %cst : f32 to vector<48x1xf32>
    %5 = arith.cmpf olt, %3, %4 : vector<48x1xf32>
    %6 = arith.extui %5 : vector<48x1xi1> to vector<48x1xi32>
    %7 = arith.sitofp %6 : vector<48x1xi32> to vector<48x1xf32>
    %c0_7 = arith.constant 0 : index
    %c0_8 = arith.constant 0 : index
    %8 = vector.load %arg0[%c0_7, %c0_8] : memref<16x8xf32, #tpu.memory_space<vmem>>, vector<16x8xf32>
    %9 = vector.extract_strided_slice %0 {offsets = [0, 0], sizes = [1, 8], strides = [1, 1]} : vector<464x128xf32> to vector<1x8xf32>
    %10 = vector.broadcast %3 : vector<48x1xf32> to vector<48x8xf32>
    %11 = vector.broadcast %9 : vector<1x8xf32> to vector<48x8xf32>
    %12 = arith.mulf %10, %11 : vector<48x8xf32>
    %13 = vector.extract_strided_slice %0 {offsets = [8, 0], sizes = [1, 8], strides = [1, 1]} : vector<464x128xf32> to vector<1x8xf32>
    %14 = vector.broadcast %13 : vector<1x8xf32> to vector<48x8xf32>
    %15 = arith.addf %12, %14 : vector<48x8xf32>
    %cst_9 = arith.constant 0.000000e+00 : f32
    %16 = vector.broadcast %cst_9 : f32 to vector<48x8xf32>
    %17 = arith.cmpf ogt, %15, %16 : vector<48x8xf32>
    %18 = math.exp %15 : vector<48x8xf32>
    %cst_10 = arith.constant 1.000000e+00 : f32
    %19 = vector.broadcast %cst_10 : f32 to vector<48x8xf32>
    %20 = arith.subf %18, %19 : vector<48x8xf32>
    %21 = arith.select %17, %15, %20 : vector<48x8xi1>, vector<48x8xf32>
    %22 = arith.truncf %8 : vector<16x8xf32> to vector<16x8xbf16>
    %cst_11 = arith.constant dense<0.000000e+00> : vector<48x8xf32>
    %23 = tpu.matmul %1, %22, %cst_11 {dimension_numbers = #tpu.dot_dimension_numbers<[1], [0], [0], [1], [0, 0, 1, 1], [], []>} : vector<48x16xbf16>, vector<16x8xbf16>, vector<48x8xf32> -> vector<48x8xf32>
    %24 = arith.mulf %21, %23 : vector<48x8xf32>
    %25 = vector.broadcast %7 : vector<48x1xf32> to vector<48x8xf32>
    %26 = arith.mulf %24, %25 : vector<48x8xf32>
    %27 = arith.truncf %26 : vector<48x8xf32> to vector<48x8xbf16>
    %cst_12 = arith.constant dense<0.000000e+00> : vector<16x8xf32>
    %28 = tpu.matmul %2, %27, %cst_12 {dimension_numbers = #tpu.dot_dimension_numbers<[0], [0], [1], [1], [0, 1, 1, 1], [], []>} : vector<48x16xbf16>, vector<48x8xbf16>, vector<16x8xf32> -> vector<16x8xf32>
    %29 = arith.addf %8, %28 : vector<16x8xf32>
    %30 = vector.extract_strided_slice %0 {offsets = [16, 0], sizes = [8, 16], strides = [1, 1]} : vector<464x128xf32> to vector<8x16xf32>
    %cst_13 = arith.constant dense<0.000000e+00> : vector<16x16xf32>
    %31 = tpu.matmul %29, %30, %cst_13 {dimension_numbers = #tpu.dot_dimension_numbers<[1], [0], [0], [1], [0, 0, 1, 1], [], []>} : vector<16x8xf32>, vector<8x16xf32>, vector<16x16xf32> -> vector<16x16xf32>
    %32 = vector.extract_strided_slice %0 {offsets = [24, 0], sizes = [1, 16], strides = [1, 1]} : vector<464x128xf32> to vector<1x16xf32>
    %33 = vector.broadcast %32 : vector<1x16xf32> to vector<16x16xf32>
    %34 = arith.addf %31, %33 : vector<16x16xf32>
    %35 = vector.extract_strided_slice %0 {offsets = [32, 0], sizes = [1, 16], strides = [1, 1]} : vector<464x128xf32> to vector<1x16xf32>
    %36 = vector.extract_strided_slice %0 {offsets = [40, 0], sizes = [1, 16], strides = [1, 1]} : vector<464x128xf32> to vector<1x16xf32>
    %cst_14 = arith.constant dense<0.000000e+00> : vector<16xf32>
    %37 = vector.multi_reduction <add>, %34, %cst_14 [0] : vector<16x16xf32> to vector<16xf32>
    %38 = vector.shape_cast %37 : vector<16xf32> to vector<1x16xf32>
    %cst_15 = arith.constant 1.600000e+01 : f32
    %39 = vector.broadcast %cst_15 : f32 to vector<1x16xf32>
    %40 = arith.divf %38, %39 : vector<1x16xf32>
    %41 = vector.broadcast %40 : vector<1x16xf32> to vector<16x16xf32>
    %42 = arith.subf %34, %41 : vector<16x16xf32>
    %43 = arith.mulf %42, %42 : vector<16x16xf32>
    %cst_16 = arith.constant dense<0.000000e+00> : vector<16xf32>
    %44 = vector.multi_reduction <add>, %43, %cst_16 [0] : vector<16x16xf32> to vector<16xf32>
    %45 = vector.shape_cast %44 : vector<16xf32> to vector<1x16xf32>
    %cst_17 = arith.constant 1.600000e+01 : f32
    %46 = vector.broadcast %cst_17 : f32 to vector<1x16xf32>
    %47 = arith.divf %45, %46 : vector<1x16xf32>
    %48 = vector.broadcast %40 : vector<1x16xf32> to vector<16x16xf32>
    %49 = arith.subf %34, %48 : vector<16x16xf32>
    %cst_18 = arith.constant 9.99999974E-6 : f32
    %50 = vector.broadcast %cst_18 : f32 to vector<1x16xf32>
    %51 = arith.addf %47, %50 : vector<1x16xf32>
    %52 = math.rsqrt %51 : vector<1x16xf32>
    %53 = vector.broadcast %52 : vector<1x16xf32> to vector<16x16xf32>
    %54 = arith.mulf %49, %53 : vector<16x16xf32>
    %55 = vector.broadcast %35 : vector<1x16xf32> to vector<16x16xf32>
    %56 = arith.mulf %54, %55 : vector<16x16xf32>
    %57 = vector.broadcast %36 : vector<1x16xf32> to vector<16x16xf32>
    %58 = arith.addf %56, %57 : vector<16x16xf32>
    %59 = vector.extract_strided_slice %0 {offsets = [48, 0], sizes = [1, 16], strides = [1, 1]} : vector<464x128xf32> to vector<1x16xf32>
    %60 = vector.broadcast %3 : vector<48x1xf32> to vector<48x16xf32>
    %61 = vector.broadcast %59 : vector<1x16xf32> to vector<48x16xf32>
    %62 = arith.mulf %60, %61 : vector<48x16xf32>
    %63 = vector.extract_strided_slice %0 {offsets = [56, 0], sizes = [1, 16], strides = [1, 1]} : vector<464x128xf32> to vector<1x16xf32>
    %64 = vector.broadcast %63 : vector<1x16xf32> to vector<48x16xf32>
    %65 = arith.addf %62, %64 : vector<48x16xf32>
    %cst_19 = arith.constant 0.000000e+00 : f32
    %66 = vector.broadcast %cst_19 : f32 to vector<48x16xf32>
    %67 = arith.cmpf ogt, %65, %66 : vector<48x16xf32>
    %68 = math.exp %65 : vector<48x16xf32>
    %cst_20 = arith.constant 1.000000e+00 : f32
    %69 = vector.broadcast %cst_20 : f32 to vector<48x16xf32>
    %70 = arith.subf %68, %69 : vector<48x16xf32>
    %71 = arith.select %67, %65, %70 : vector<48x16xi1>, vector<48x16xf32>
    %72 = arith.truncf %58 : vector<16x16xf32> to vector<16x16xbf16>
    %cst_21 = arith.constant dense<0.000000e+00> : vector<48x16xf32>
    %73 = tpu.matmul %1, %72, %cst_21 {dimension_numbers = #tpu.dot_dimension_numbers<[1], [0], [0], [1], [0, 0, 1, 1], [], []>} : vector<48x16xbf16>, vector<16x16xbf16>, vector<48x16xf32> -> vector<48x16xf32>
    %74 = arith.mulf %71, %73 : vector<48x16xf32>
    %75 = vector.broadcast %7 : vector<48x1xf32> to vector<48x16xf32>
    %76 = arith.mulf %74, %75 : vector<48x16xf32>
    %77 = arith.truncf %76 : vector<48x16xf32> to vector<48x16xbf16>
    %cst_22 = arith.constant dense<0.000000e+00> : vector<16x16xf32>
    %78 = tpu.matmul %2, %77, %cst_22 {dimension_numbers = #tpu.dot_dimension_numbers<[0], [0], [1], [1], [0, 1, 1, 1], [], []>} : vector<48x16xbf16>, vector<48x16xbf16>, vector<16x16xf32> -> vector<16x16xf32>
    %79 = arith.addf %58, %78 : vector<16x16xf32>
    %80 = vector.extract_strided_slice %0 {offsets = [64, 0], sizes = [16, 16], strides = [1, 1]} : vector<464x128xf32> to vector<16x16xf32>
    %cst_23 = arith.constant dense<0.000000e+00> : vector<16x16xf32>
    %81 = tpu.matmul %79, %80, %cst_23 {dimension_numbers = #tpu.dot_dimension_numbers<[1], [0], [0], [1], [0, 0, 1, 1], [], []>} : vector<16x16xf32>, vector<16x16xf32>, vector<16x16xf32> -> vector<16x16xf32>
    %82 = vector.extract_strided_slice %0 {offsets = [80, 0], sizes = [1, 16], strides = [1, 1]} : vector<464x128xf32> to vector<1x16xf32>
    %83 = vector.broadcast %82 : vector<1x16xf32> to vector<16x16xf32>
    %84 = arith.addf %81, %83 : vector<16x16xf32>
    %85 = vector.extract_strided_slice %0 {offsets = [88, 0], sizes = [1, 16], strides = [1, 1]} : vector<464x128xf32> to vector<1x16xf32>
    %86 = vector.extract_strided_slice %0 {offsets = [96, 0], sizes = [1, 16], strides = [1, 1]} : vector<464x128xf32> to vector<1x16xf32>
    %cst_24 = arith.constant dense<0.000000e+00> : vector<16xf32>
    %87 = vector.multi_reduction <add>, %84, %cst_24 [0] : vector<16x16xf32> to vector<16xf32>
    %88 = vector.shape_cast %87 : vector<16xf32> to vector<1x16xf32>
    %cst_25 = arith.constant 1.600000e+01 : f32
    %89 = vector.broadcast %cst_25 : f32 to vector<1x16xf32>
    %90 = arith.divf %88, %89 : vector<1x16xf32>
    %91 = vector.broadcast %90 : vector<1x16xf32> to vector<16x16xf32>
    %92 = arith.subf %84, %91 : vector<16x16xf32>
    %93 = arith.mulf %92, %92 : vector<16x16xf32>
    %cst_26 = arith.constant dense<0.000000e+00> : vector<16xf32>
    %94 = vector.multi_reduction <add>, %93, %cst_26 [0] : vector<16x16xf32> to vector<16xf32>
    %95 = vector.shape_cast %94 : vector<16xf32> to vector<1x16xf32>
    %cst_27 = arith.constant 1.600000e+01 : f32
    %96 = vector.broadcast %cst_27 : f32 to vector<1x16xf32>
    %97 = arith.divf %95, %96 : vector<1x16xf32>
    %98 = vector.broadcast %90 : vector<1x16xf32> to vector<16x16xf32>
    %99 = arith.subf %84, %98 : vector<16x16xf32>
    %cst_28 = arith.constant 9.99999974E-6 : f32
    %100 = vector.broadcast %cst_28 : f32 to vector<1x16xf32>
    %101 = arith.addf %97, %100 : vector<1x16xf32>
    %102 = math.rsqrt %101 : vector<1x16xf32>
    %103 = vector.broadcast %102 : vector<1x16xf32> to vector<16x16xf32>
    %104 = arith.mulf %99, %103 : vector<16x16xf32>
    %105 = vector.broadcast %85 : vector<1x16xf32> to vector<16x16xf32>
    %106 = arith.mulf %104, %105 : vector<16x16xf32>
    %107 = vector.broadcast %86 : vector<1x16xf32> to vector<16x16xf32>
    %108 = arith.addf %106, %107 : vector<16x16xf32>
    %109 = vector.extract_strided_slice %0 {offsets = [104, 0], sizes = [1, 16], strides = [1, 1]} : vector<464x128xf32> to vector<1x16xf32>
    %110 = vector.broadcast %3 : vector<48x1xf32> to vector<48x16xf32>
    %111 = vector.broadcast %109 : vector<1x16xf32> to vector<48x16xf32>
    %112 = arith.mulf %110, %111 : vector<48x16xf32>
    %113 = vector.extract_strided_slice %0 {offsets = [112, 0], sizes = [1, 16], strides = [1, 1]} : vector<464x128xf32> to vector<1x16xf32>
    %114 = vector.broadcast %113 : vector<1x16xf32> to vector<48x16xf32>
    %115 = arith.addf %112, %114 : vector<48x16xf32>
    %cst_29 = arith.constant 0.000000e+00 : f32
    %116 = vector.broadcast %cst_29 : f32 to vector<48x16xf32>
    %117 = arith.cmpf ogt, %115, %116 : vector<48x16xf32>
    %118 = math.exp %115 : vector<48x16xf32>
    %cst_30 = arith.constant 1.000000e+00 : f32
    %119 = vector.broadcast %cst_30 : f32 to vector<48x16xf32>
    %120 = arith.subf %118, %119 : vector<48x16xf32>
    %121 = arith.select %117, %115, %120 : vector<48x16xi1>, vector<48x16xf32>
    %122 = arith.truncf %108 : vector<16x16xf32> to vector<16x16xbf16>
    %cst_31 = arith.constant dense<0.000000e+00> : vector<48x16xf32>
    %123 = tpu.matmul %1, %122, %cst_31 {dimension_numbers = #tpu.dot_dimension_numbers<[1], [0], [0], [1], [0, 0, 1, 1], [], []>} : vector<48x16xbf16>, vector<16x16xbf16>, vector<48x16xf32> -> vector<48x16xf32>
    %124 = arith.mulf %121, %123 : vector<48x16xf32>
    %125 = vector.broadcast %7 : vector<48x1xf32> to vector<48x16xf32>
    %126 = arith.mulf %124, %125 : vector<48x16xf32>
    %127 = arith.truncf %126 : vector<48x16xf32> to vector<48x16xbf16>
    %cst_32 = arith.constant dense<0.000000e+00> : vector<16x16xf32>
    %128 = tpu.matmul %2, %127, %cst_32 {dimension_numbers = #tpu.dot_dimension_numbers<[0], [0], [1], [1], [0, 1, 1, 1], [], []>} : vector<48x16xbf16>, vector<48x16xbf16>, vector<16x16xf32> -> vector<16x16xf32>
    %129 = arith.addf %108, %128 : vector<16x16xf32>
    %130 = vector.extract_strided_slice %0 {offsets = [120, 0], sizes = [16, 16], strides = [1, 1]} : vector<464x128xf32> to vector<16x16xf32>
    %cst_33 = arith.constant dense<0.000000e+00> : vector<16x16xf32>
    %131 = tpu.matmul %129, %130, %cst_33 {dimension_numbers = #tpu.dot_dimension_numbers<[1], [0], [0], [1], [0, 0, 1, 1], [], []>} : vector<16x16xf32>, vector<16x16xf32>, vector<16x16xf32> -> vector<16x16xf32>
    %132 = vector.extract_strided_slice %0 {offsets = [136, 0], sizes = [1, 16], strides = [1, 1]} : vector<464x128xf32> to vector<1x16xf32>
    %133 = vector.broadcast %132 : vector<1x16xf32> to vector<16x16xf32>
    %134 = arith.addf %131, %133 : vector<16x16xf32>
    %135 = vector.extract_strided_slice %0 {offsets = [144, 0], sizes = [1, 16], strides = [1, 1]} : vector<464x128xf32> to vector<1x16xf32>
    %136 = vector.extract_strided_slice %0 {offsets = [152, 0], sizes = [1, 16], strides = [1, 1]} : vector<464x128xf32> to vector<1x16xf32>
    %cst_34 = arith.constant dense<0.000000e+00> : vector<16xf32>
    %137 = vector.multi_reduction <add>, %134, %cst_34 [0] : vector<16x16xf32> to vector<16xf32>
    %138 = vector.shape_cast %137 : vector<16xf32> to vector<1x16xf32>
    %cst_35 = arith.constant 1.600000e+01 : f32
    %139 = vector.broadcast %cst_35 : f32 to vector<1x16xf32>
    %140 = arith.divf %138, %139 : vector<1x16xf32>
    %141 = vector.broadcast %140 : vector<1x16xf32> to vector<16x16xf32>
    %142 = arith.subf %134, %141 : vector<16x16xf32>
    %143 = arith.mulf %142, %142 : vector<16x16xf32>
    %cst_36 = arith.constant dense<0.000000e+00> : vector<16xf32>
    %144 = vector.multi_reduction <add>, %143, %cst_36 [0] : vector<16x16xf32> to vector<16xf32>
    %145 = vector.shape_cast %144 : vector<16xf32> to vector<1x16xf32>
    %cst_37 = arith.constant 1.600000e+01 : f32
    %146 = vector.broadcast %cst_37 : f32 to vector<1x16xf32>
    %147 = arith.divf %145, %146 : vector<1x16xf32>
    %148 = vector.broadcast %140 : vector<1x16xf32> to vector<16x16xf32>
    %149 = arith.subf %134, %148 : vector<16x16xf32>
    %cst_38 = arith.constant 9.99999974E-6 : f32
    %150 = vector.broadcast %cst_38 : f32 to vector<1x16xf32>
    %151 = arith.addf %147, %150 : vector<1x16xf32>
    %152 = math.rsqrt %151 : vector<1x16xf32>
    %153 = vector.broadcast %152 : vector<1x16xf32> to vector<16x16xf32>
    %154 = arith.mulf %149, %153 : vector<16x16xf32>
    %155 = vector.broadcast %135 : vector<1x16xf32> to vector<16x16xf32>
    %156 = arith.mulf %154, %155 : vector<16x16xf32>
    %157 = vector.broadcast %136 : vector<1x16xf32> to vector<16x16xf32>
    %158 = arith.addf %156, %157 : vector<16x16xf32>
    %159 = arith.truncf %158 : vector<16x16xf32> to vector<16x16xbf16>
    %cst_39 = arith.constant dense<0.000000e+00> : vector<48x16xf32>
    %160 = tpu.matmul %2, %159, %cst_39 {dimension_numbers = #tpu.dot_dimension_numbers<[1], [0], [0], [1], [0, 0, 1, 1], [], []>} : vector<48x16xbf16>, vector<16x16xbf16>, vector<48x16xf32> -> vector<48x16xf32>
    %161 = arith.truncf %158 : vector<16x16xf32> to vector<16x16xbf16>
    %cst_40 = arith.constant dense<0.000000e+00> : vector<48x16xf32>
    %162 = tpu.matmul %1, %161, %cst_40 {dimension_numbers = #tpu.dot_dimension_numbers<[1], [0], [0], [1], [0, 0, 1, 1], [], []>} : vector<48x16xbf16>, vector<16x16xbf16>, vector<48x16xf32> -> vector<48x16xf32>
    %163 = vector.extract_strided_slice %0 {offsets = [160, 0], sizes = [16, 96], strides = [1, 1]} : vector<464x128xf32> to vector<16x96xf32>
    %cst_41 = arith.constant dense<0.000000e+00> : vector<48x96xf32>
    %164 = tpu.matmul %160, %163, %cst_41 {dimension_numbers = #tpu.dot_dimension_numbers<[1], [0], [0], [1], [0, 0, 1, 1], [], []>} : vector<48x16xf32>, vector<16x96xf32>, vector<48x96xf32> -> vector<48x96xf32>
    %165 = vector.extract_strided_slice %164 {offsets = [0, 0], sizes = [48, 48], strides = [1, 1]} : vector<48x96xf32> to vector<48x48xf32>
    %166 = vector.extract_strided_slice %0 {offsets = [176, 0], sizes = [16, 48], strides = [1, 1]} : vector<464x128xf32> to vector<16x48xf32>
    %cst_42 = arith.constant dense<0.000000e+00> : vector<48x48xf32>
    %167 = tpu.matmul %162, %166, %cst_42 {dimension_numbers = #tpu.dot_dimension_numbers<[1], [0], [0], [1], [0, 0, 1, 1], [], []>} : vector<48x16xf32>, vector<16x48xf32>, vector<48x48xf32> -> vector<48x48xf32>
    %168 = arith.addf %165, %167 : vector<48x48xf32>
    %169 = vector.extract_strided_slice %0 {offsets = [192, 0], sizes = [1, 48], strides = [1, 1]} : vector<464x128xf32> to vector<1x48xf32>
    %170 = vector.broadcast %3 : vector<48x1xf32> to vector<48x48xf32>
    %171 = vector.broadcast %169 : vector<1x48xf32> to vector<48x48xf32>
    %172 = arith.mulf %170, %171 : vector<48x48xf32>
    %173 = arith.addf %168, %172 : vector<48x48xf32>
    %174 = vector.extract_strided_slice %0 {offsets = [200, 0], sizes = [1, 48], strides = [1, 1]} : vector<464x128xf32> to vector<1x48xf32>
    %175 = vector.broadcast %174 : vector<1x48xf32> to vector<48x48xf32>
    %176 = arith.addf %173, %175 : vector<48x48xf32>
    %cst_43 = arith.constant 0.000000e+00 : f32
    %177 = vector.broadcast %cst_43 : f32 to vector<48x48xf32>
    %178 = arith.cmpf ogt, %176, %177 : vector<48x48xf32>
    %179 = math.exp %176 : vector<48x48xf32>
    %cst_44 = arith.constant 1.000000e+00 : f32
    %180 = vector.broadcast %cst_44 : f32 to vector<48x48xf32>
    %181 = arith.subf %179, %180 : vector<48x48xf32>
    %182 = arith.select %178, %176, %181 : vector<48x48xi1>, vector<48x48xf32>
    %183 = vector.broadcast %7 : vector<48x1xf32> to vector<48x48xf32>
    %184 = arith.mulf %182, %183 : vector<48x48xf32>
    %185 = vector.extract_strided_slice %164 {offsets = [0, 48], sizes = [48, 48], strides = [1, 1]} : vector<48x96xf32> to vector<48x48xf32>
    %186 = vector.extract_strided_slice %0 {offsets = [208, 0], sizes = [48, 48], strides = [1, 1]} : vector<464x128xf32> to vector<48x48xf32>
    %cst_45 = arith.constant dense<0.000000e+00> : vector<48x48xf32>
    %187 = tpu.matmul %184, %186, %cst_45 {dimension_numbers = #tpu.dot_dimension_numbers<[1], [0], [0], [1], [0, 0, 1, 1], [], []>} : vector<48x48xf32>, vector<48x48xf32>, vector<48x48xf32> -> vector<48x48xf32>
    %188 = arith.mulf %185, %187 : vector<48x48xf32>
    %189 = vector.extract_strided_slice %0 {offsets = [256, 0], sizes = [48, 48], strides = [1, 1]} : vector<464x128xf32> to vector<48x48xf32>
    %cst_46 = arith.constant dense<0.000000e+00> : vector<48x48xf32>
    %190 = tpu.matmul %188, %189, %cst_46 {dimension_numbers = #tpu.dot_dimension_numbers<[1], [0], [0], [1], [0, 0, 1, 1], [], []>} : vector<48x48xf32>, vector<48x48xf32>, vector<48x48xf32> -> vector<48x48xf32>
    %191 = math.tanh %190 : vector<48x48xf32>
    %192 = arith.truncf %191 : vector<48x48xf32> to vector<48x48xbf16>
    %cst_47 = arith.constant dense<0.000000e+00> : vector<16x48xf32>
    %193 = tpu.matmul %2, %192, %cst_47 {dimension_numbers = #tpu.dot_dimension_numbers<[0], [0], [1], [1], [0, 1, 1, 1], [], []>} : vector<48x16xbf16>, vector<48x48xbf16>, vector<16x48xf32> -> vector<16x48xf32>
    %194 = arith.truncf %193 : vector<16x48xf32> to vector<16x48xbf16>
    %cst_48 = arith.constant dense<0.000000e+00> : vector<48x48xf32>
    %195 = tpu.matmul %2, %194, %cst_48 {dimension_numbers = #tpu.dot_dimension_numbers<[1], [0], [0], [1], [0, 0, 1, 1], [], []>} : vector<48x16xbf16>, vector<16x48xbf16>, vector<48x48xf32> -> vector<48x48xf32>
    %196 = arith.subf %191, %195 : vector<48x48xf32>
    %197 = math.exp %196 : vector<48x48xf32>
    %198 = arith.mulf %197, %184 : vector<48x48xf32>
    %199 = arith.truncf %198 : vector<48x48xf32> to vector<48x48xbf16>
    %cst_49 = arith.constant dense<0.000000e+00> : vector<16x48xf32>
    %200 = tpu.matmul %2, %199, %cst_49 {dimension_numbers = #tpu.dot_dimension_numbers<[0], [0], [1], [1], [0, 1, 1, 1], [], []>} : vector<48x16xbf16>, vector<48x48xbf16>, vector<16x48xf32> -> vector<16x48xf32>
    %201 = tpu.concatenate %158, %158, %158 in 1 : vector<16x16xf32>, vector<16x16xf32>, vector<16x16xf32> -> vector<16x48xf32>
    %202 = arith.addf %201, %200 : vector<16x48xf32>
    %203 = vector.extract_strided_slice %0 {offsets = [304, 0], sizes = [48, 48], strides = [1, 1]} : vector<464x128xf32> to vector<48x48xf32>
    %cst_50 = arith.constant dense<0.000000e+00> : vector<16x48xf32>
    %204 = tpu.matmul %202, %203, %cst_50 {dimension_numbers = #tpu.dot_dimension_numbers<[1], [0], [0], [1], [0, 0, 1, 1], [], []>} : vector<16x48xf32>, vector<48x48xf32>, vector<16x48xf32> -> vector<16x48xf32>
    %205 = vector.extract_strided_slice %0 {offsets = [352, 0], sizes = [1, 48], strides = [1, 1]} : vector<464x128xf32> to vector<1x48xf32>
    %206 = vector.broadcast %205 : vector<1x48xf32> to vector<16x48xf32>
    %207 = arith.addf %204, %206 : vector<16x48xf32>
    %208 = vector.extract_strided_slice %0 {offsets = [360, 0], sizes = [1, 48], strides = [1, 1]} : vector<464x128xf32> to vector<1x48xf32>
    %209 = vector.extract_strided_slice %0 {offsets = [368, 0], sizes = [1, 48], strides = [1, 1]} : vector<464x128xf32> to vector<1x48xf32>
    %cst_51 = arith.constant dense<0.000000e+00> : vector<48xf32>
    %210 = vector.multi_reduction <add>, %207, %cst_51 [0] : vector<16x48xf32> to vector<48xf32>
    %211 = vector.shape_cast %210 : vector<48xf32> to vector<1x48xf32>
    %cst_52 = arith.constant 1.600000e+01 : f32
    %212 = vector.broadcast %cst_52 : f32 to vector<1x48xf32>
    %213 = arith.divf %211, %212 : vector<1x48xf32>
    %214 = vector.broadcast %213 : vector<1x48xf32> to vector<16x48xf32>
    %215 = arith.subf %207, %214 : vector<16x48xf32>
    %216 = arith.mulf %215, %215 : vector<16x48xf32>
    %cst_53 = arith.constant dense<0.000000e+00> : vector<48xf32>
    %217 = vector.multi_reduction <add>, %216, %cst_53 [0] : vector<16x48xf32> to vector<48xf32>
    %218 = vector.shape_cast %217 : vector<48xf32> to vector<1x48xf32>
    %cst_54 = arith.constant 1.600000e+01 : f32
    %219 = vector.broadcast %cst_54 : f32 to vector<1x48xf32>
    %220 = arith.divf %218, %219 : vector<1x48xf32>
    %221 = vector.broadcast %213 : vector<1x48xf32> to vector<16x48xf32>
    %222 = arith.subf %207, %221 : vector<16x48xf32>
    %cst_55 = arith.constant 9.99999974E-6 : f32
    %223 = vector.broadcast %cst_55 : f32 to vector<1x48xf32>
    %224 = arith.addf %220, %223 : vector<1x48xf32>
    %225 = math.rsqrt %224 : vector<1x48xf32>
    %226 = vector.broadcast %225 : vector<1x48xf32> to vector<16x48xf32>
    %227 = arith.mulf %222, %226 : vector<16x48xf32>
    %228 = vector.broadcast %208 : vector<1x48xf32> to vector<16x48xf32>
    %229 = arith.mulf %227, %228 : vector<16x48xf32>
    %230 = vector.broadcast %209 : vector<1x48xf32> to vector<16x48xf32>
    %231 = arith.addf %229, %230 : vector<16x48xf32>
    %c0_56 = arith.constant 0 : index
    %c0_57 = arith.constant 0 : index
    %232 = vector.load %arg4[%c0_56, %c0_57] : memref<2x16xf32, #tpu.memory_space<vmem>>, vector<2x16xf32>
    %cst_58 = arith.constant dense<0.000000e+00> : vector<2x48xf32>
    %233 = tpu.matmul %232, %231, %cst_58 {dimension_numbers = #tpu.dot_dimension_numbers<[1], [0], [0], [1], [0, 0, 1, 1], [], []>} : vector<2x16xf32>, vector<16x48xf32>, vector<2x48xf32> -> vector<2x48xf32>
    %234 = vector.extract_strided_slice %0 {offsets = [376, 0], sizes = [48, 16], strides = [1, 1]} : vector<464x128xf32> to vector<48x16xf32>
    %cst_59 = arith.constant dense<0.000000e+00> : vector<2x16xf32>
    %235 = tpu.matmul %233, %234, %cst_59 {dimension_numbers = #tpu.dot_dimension_numbers<[1], [0], [0], [1], [0, 0, 1, 1], [], []>} : vector<2x48xf32>, vector<48x16xf32>, vector<2x16xf32> -> vector<2x16xf32>
    %236 = vector.extract_strided_slice %0 {offsets = [424, 0], sizes = [1, 16], strides = [1, 1]} : vector<464x128xf32> to vector<1x16xf32>
    %237 = vector.broadcast %236 : vector<1x16xf32> to vector<2x16xf32>
    %238 = arith.addf %235, %237 : vector<2x16xf32>
    %cst_60 = arith.constant 0.000000e+00 : f32
    %239 = vector.broadcast %cst_60 : f32 to vector<2x16xf32>
    %240 = arith.cmpf oge, %238, %239 : vector<2x16xf32>
    %241 = vector.extract_strided_slice %0 {offsets = [432, 0], sizes = [1, 1], strides = [1, 1]} : vector<464x128xf32> to vector<1x1xf32>
    %242 = vector.broadcast %241 : vector<1x1xf32> to vector<2x16xf32>
    %243 = arith.mulf %242, %238 : vector<2x16xf32>
    %244 = arith.select %240, %238, %243 : vector<2x16xi1>, vector<2x16xf32>
    %245 = vector.extract_strided_slice %0 {offsets = [440, 0], sizes = [16, 3], strides = [1, 1]} : vector<464x128xf32> to vector<16x3xf32>
    %cst_61 = arith.constant dense<0.000000e+00> : vector<2x3xf32>
    %246 = tpu.matmul %244, %245, %cst_61 {dimension_numbers = #tpu.dot_dimension_numbers<[1], [0], [0], [1], [0, 0, 1, 1], [], []>} : vector<2x16xf32>, vector<16x3xf32>, vector<2x3xf32> -> vector<2x3xf32>
    %247 = vector.extract_strided_slice %0 {offsets = [456, 0], sizes = [1, 3], strides = [1, 1]} : vector<464x128xf32> to vector<1x3xf32>
    %248 = vector.broadcast %247 : vector<1x3xf32> to vector<2x3xf32>
    %249 = arith.addf %246, %248 : vector<2x3xf32>
    %c0_62 = arith.constant 0 : index
    %c0_63 = arith.constant 0 : index
    %250 = vector.load %arg6[%c0_62, %c0_63] : memref<2x3xf32, #tpu.memory_space<vmem>>, vector<2x3xf32>
    tpu.vector_store %arg6[%c0_62, %c0_63], %249 {strides = array<i32>} : memref<2x3xf32, #tpu.memory_space<vmem>>, vector<2x3xf32>,
    return
  }
}

</mosaic_0001>

<llo_original>
// kernel: tpu_custom_call.1
$region0: #{tpu_custom_call.1}
  #allocation0 [shape = 'u32[]', space=smem, size = 0x4, offset = 0x4, fixed_abs, tag = 'smem constant byte address 0x4 - core index']
  #allocation1 [shape = 'u32[72,128]{1,0:T(1,128)}', space=vmem, size = 0x9000, scoped, tag = 'internal scratch']
  %s0 = inlined_call_operand.vmem [shape: f32[16,8], index: 0, kind: input, shape index: {}]
  %s1 = inlined_call_operand.vmem [shape: bf16[48,16], index: 1, kind: input, shape index: {}]
  %s2 = inlined_call_operand.vmem [shape: bf16[48,16], index: 2, kind: input, shape index: {}]
  %s3 = inlined_call_operand.vmem [shape: f32[48,1], index: 3, kind: input, shape index: {}]
  %s4 = inlined_call_operand.vmem [shape: f32[2,16], index: 4, kind: input, shape index: {}]
  %s5 = inlined_call_operand.hbm [shape: f32[464,128], index: 5, kind: input, shape index: {}]
  %s6 = inlined_call_operand.hbm [shape: f32[2,3], index: 6, kind: output, shape index: {}]
  %s7 = sld [smem:[#allocation0]]
  $region38: #{tpu_custom_call.1} parent=0
    _
  %s9 = ssub.s32 1, %s7
  %s10 = scalar_select 0, %s9, %s7
  $region1: #{tpu_custom_call.1} parent=0
    #allocation2 [shape = 'u8[237568]{0}', space=vmem, size = 0x3a000, scoped, tag = 'input window, operand 5, single buffered']
    #allocation3 [shape = 's32[1]{0}', space=sflag, size = 0x4, scoped, tag = 'scoped memory for tpu_custom_call.1']
    #allocation4 [shape = 's32[1]{0}', space=sflag, size = 0x4, scoped, tag = 'scoped memory for tpu_custom_call.1']
    #allocation5 [shape = 'u8[1024]{0}', space=vmem, size = 0x400, scoped, tag = 'output window, operand 0, single buffered']
    %11 = vsyncpa [#allocation3], 0
    %12 = vsyncpa [#allocation4], 0
    // Predicated region
    $region2: #{tpu_custom_call.1} parent=1 // pred_check
      _
    $region3: #{tpu_custom_call.1} parent=1 // pred_check_branch
      %14 = sbr.rel (0) target = $region5
    $region4: #{tpu_custom_call.1} parent=1 // pred_region
      _
    $region5: #{tpu_custom_call.1} parent=1 // pred_fallthru
      _
    // Predicated region
    $region6: #{tpu_custom_call.1} parent=1 // pred_check
      _
    $region7: #{tpu_custom_call.1} parent=1 // pred_check_branch
      %16 = sbr.rel (0) target = $region9
    $region8: #{tpu_custom_call.1} parent=1 // pred_region
      _
    $region9: #{tpu_custom_call.1} parent=1 // pred_fallthru
      _
    // Predicated region
    $region10: #{tpu_custom_call.1} parent=1 // pred_check
      _
    $region11: #{tpu_custom_call.1} parent=1 // pred_check_branch
      %18 = sbr.rel (0) target = $region13
    $region12: #{tpu_custom_call.1} parent=1 // pred_region
      _
    $region13: #{tpu_custom_call.1} parent=1 // pred_fallthru
      _
    // Predicated region
    $region14: #{tpu_custom_call.1} parent=1 // pred_check
      _
    $region15: #{tpu_custom_call.1} parent=1 // pred_check_branch
      %20 = sbr.rel (0) target = $region17
    $region16: #{tpu_custom_call.1} parent=1 // pred_region
      _
    $region17: #{tpu_custom_call.1} parent=1 // pred_fallthru
      _
    // Predicated region
    $region18: #{tpu_custom_call.1} parent=1 // pred_check
      _
    $region19: #{tpu_custom_call.1} parent=1 // pred_check_branch
      %22 = sbr.rel (0) target = $region21
    $region20: #{tpu_custom_call.1} parent=1 // pred_region
      _
    $region21: #{tpu_custom_call.1} parent=1 // pred_fallthru
      _
    // Predicated region
    $region22: #{tpu_custom_call.1} parent=1 // pred_check
      _
    $region23: #{tpu_custom_call.1} parent=1 // pred_check_branch
      %24 = sbr.rel (0) target = $region25
    $region24: #{tpu_custom_call.1} parent=1 // pred_region
      %26 = vsyncadd [#allocation3], 0
      %s27 = sshll.u32 %s5, 4
      %s28 = int_to_ptr.hbm [resolvable:$true] %s27
      %s29 = sshll.u32 [#allocation2], 4
      %s30 = int_to_ptr.vmem [resolvable:$true] %s29
      %35 = dma.hbm_to_vmem [thread:$0]  %s28, 7424, %s30, [#allocation3], 128, 128, 8
    $region25: #{tpu_custom_call.1} parent=1 // pred_fallthru
      _
    // Predicated region
    $region26: #{tpu_custom_call.1} parent=1 // pred_check
      _
    $region27: #{tpu_custom_call.1} parent=1 // pred_check_branch
      %37 = sbr.rel (0) target = $region29
    $region28: #{tpu_custom_call.1} parent=1 // pred_region
      %39 = dma.done [#allocation3], 7424
    $region29: #{tpu_custom_call.1} parent=1 // pred_fallthru
      _
    %v41 = vld [vmem:[#allocation2] sm:$0xff]
    %v42 = vld [vmem:[#allocation2 + $0x8] sm:$0xff]
    %v43 = vld [vmem:[#allocation2 + $0x10] sm:$0xff]
    %v44 = vld [vmem:[#allocation2 + $0x18] sm:$0xff]
    %v45 = vld [vmem:[#allocation2 + $0x20] sm:$0xff]
    %v46 = vld [vmem:[#allocation2 + $0x28] sm:$0xff]
    %v47 = vld [vmem:[#allocation2 + $0x30] sm:$0xff]
    %v48 = vld [vmem:[#allocation2 + $0x38] sm:$0xff]
    %v49 = vld [vmem:[#allocation2 + $0x40] sm:$0xff]
    %v50 = vld [vmem:[#allocation2 + $0x48] sm:$0xff]
    %v51 = vld [vmem:[#allocation2 + $0x50] sm:$0xff]
    %v52 = vld [vmem:[#allocation2 + $0x58] sm:$0xff]
    %v53 = vld [vmem:[#allocation2 + $0x60] sm:$0xff]
    %v54 = vld [vmem:[#allocation2 + $0x68] sm:$0xff]
    %v55 = vld [vmem:[#allocation2 + $0x70] sm:$0xff]
    %v56 = vld [vmem:[#allocation2 + $0x78] sm:$0xff]
    %v57 = vld [vmem:[#allocation2 + $0x80] sm:$0xff]
    %v58 = vld [vmem:[#allocation2 + $0x88] sm:$0xff]
    %v59 = vld [vmem:[#allocation2 + $0x90] sm:$0xff]
    %v60 = vld [vmem:[#allocation2 + $0x98] sm:$0xff]
    %v61 = vld [vmem:[#allocation2 + $0xa0] sm:$0xff]
    %v62 = vld [vmem:[#allocation2 + $0xa8] sm:$0xff]
    %v63 = vld [vmem:[#allocation2 + $0xb0] sm:$0xff]
    %v64 = vld [vmem:[#allocation2 + $0xb8] sm:$0xff]
    %v65 = vld [vmem:[#allocation2 + $0xc0] sm:$0xff]
    %v66 = vld [vmem:[#allocation2 + $0xc8] sm:$0xff]
    %v67 = vld [vmem:[#allocation2 + $0xd0] sm:$0xff]
    %v68 = vld [vmem:[#allocation2 + $0xd8] sm:$0xff]
    %v69 = vld [vmem:[#allocation2 + $0xe0] sm:$0xff]
    %v70 = vld [vmem:[#allocation2 + $0xe8] sm:$0xff]
    %v71 = vld [vmem:[#allocation2 + $0xf0] sm:$0xff]
    %v72 = vld [vmem:[#allocation2 + $0xf8] sm:$0xff]
    %v73 = vld [vmem:[#allocation2 + $0x100] sm:$0xff]
    %v74 = vld [vmem:[#allocation2 + $0x108] sm:$0xff]
    %v75 = vld [vmem:[#allocation2 + $0x110] sm:$0xff]
    %v76 = vld [vmem:[#allocation2 + $0x118] sm:$0xff]
    %v77 = vld [vmem:[#allocation2 + $0x120] sm:$0xff]
    %v78 = vld [vmem:[#allocation2 + $0x128] sm:$0xff]
    %v79 = vld [vmem:[#allocation2 + $0x130] sm:$0xff]
    %v80 = vld [vmem:[#allocation2 + $0x138] sm:$0xff]
    %v81 = vld [vmem:[#allocation2 + $0x140] sm:$0xff]
    %v82 = vld [vmem:[#allocation2 + $0x148] sm:$0xff]
    %v83 = vld [vmem:[#allocation2 + $0x150] sm:$0xff]
    %v84 = vld [vmem:[#allocation2 + $0x158] sm:$0xff]
    %v85 = vld [vmem:[#allocation2 + $0x160] sm:$0xff]
    %v86 = vld [vmem:[#allocation2 + $0x168] sm:$0xff]
    %v87 = vld [vmem:[#allocation2 + $0x170] sm:$0xff]
    %v88 = vld [vmem:[#allocation2 + $0x178] sm:$0xff]
    %v89 = vld [vmem:[#allocation2 + $0x180] sm:$0xff]
    %v90 = vld [vmem:[#allocation2 + $0x188] sm:$0xff]
    %v91 = vld [vmem:[#allocation2 + $0x190] sm:$0xff]
    %v92 = vld [vmem:[#allocation2 + $0x198] sm:$0xff]
    %v93 = vld [vmem:[#allocation2 + $0x1a0] sm:$0xff]
    %v94 = vld [vmem:[#allocation2 + $0x1a8] sm:$0xff]
    %v95 = vld [vmem:[#allocation2 + $0x1b0] sm:$0xff]
    %v96 = vld [vmem:[#allocation2 + $0x1b8] sm:$0xff]
    %v97 = vld [vmem:[#allocation2 + $0x1c0] sm:$0xff]
    %v98 = vld [vmem:[#allocation2 + $0x1c8] sm:$0xff]
    %v99 = vld [vmem:[%s1] sm:$0xf]
    %v100 = vld [vmem:[%s1 + $0x4] sm:$0xf]
    %v101 = vld [vmem:[%s1 + $0x8] sm:$0xf]
    %v102 = vld [vmem:[%s1 + $0xc] sm:$0xf]
    %v103 = vld [vmem:[%s1 + $0x10] sm:$0xf]
    %v104 = vld [vmem:[%s1 + $0x14] sm:$0xf]
    %v105 = vld [vmem:[%s2] sm:$0xf]
    %v106 = vld [vmem:[%s2 + $0x4] sm:$0xf]
    %v107 = vld [vmem:[%s2 + $0x8] sm:$0xf]
    %v108 = vld [vmem:[%s2 + $0xc] sm:$0xf]
    %v109 = vld [vmem:[%s2 + $0x10] sm:$0xf]
    %v110 = vld [vmem:[%s2 + $0x14] sm:$0xf]
    %v111 = vld [vmem:[%s3] sm:$0xff]
    %v112 = vld [vmem:[%s3 + $0x8] sm:$0xff]
    %v113 = vld [vmem:[%s3 + $0x10] sm:$0xff]
    %v114 = vld [vmem:[%s3 + $0x18] sm:$0xff]
    %v115 = vld [vmem:[%s3 + $0x20] sm:$0xff]
    %v116 = vld [vmem:[%s3 + $0x28] sm:$0xff]
    %vm117 = vcmp.lt.f32.partialorder %v111, 8.0
    %vm118 = vcmp.lt.f32.partialorder %v112, 8.0
    %vm119 = vcmp.lt.f32.partialorder %v113, 8.0
    %vm120 = vcmp.lt.f32.partialorder %v114, 8.0
    %vm121 = vcmp.lt.f32.partialorder %v115, 8.0
    %vm122 = vcmp.lt.f32.partialorder %v116, 8.0
    %v123 = vsel %vm117, 1, 0
    %v124 = vsel %vm118, 1, 0
    %v125 = vsel %vm119, 1, 0
    %v126 = vsel %vm120, 1, 0
    %v127 = vsel %vm121, 1, 0
    %v128 = vsel %vm122, 1, 0
    %v129 = vcvt.s32.f32 %v123
    %v130 = vcvt.s32.f32 %v124
    %v131 = vcvt.s32.f32 %v125
    %v132 = vcvt.s32.f32 %v126
    %v133 = vcvt.s32.f32 %v127
    %v134 = vcvt.s32.f32 %v128
    %v135 = vld [vmem:[%s0] sm:$0xff]
    %v136 = vld [vmem:[%s0 + $0x8] sm:$0xff]
    %138 = vset.pattern.permute.xlu0 0
    %139 = vperm.xlu0 %138, %v111
    %v140 = vpop.permute.xlu0 %139
    %143 = vset.pattern.permute.xlu0 0
    %144 = vperm.xlu0 %143, %v112
    %v145 = vpop.permute.xlu0 %144
    %148 = vset.pattern.permute.xlu0 0
    %149 = vperm.xlu0 %148, %v113
    %v150 = vpop.permute.xlu0 %149
    %153 = vset.pattern.permute.xlu0 0
    %154 = vperm.xlu0 %153, %v114
    %v155 = vpop.permute.xlu0 %154
    %158 = vset.pattern.permute.xlu0 0
    %159 = vperm.xlu0 %158, %v115
    %v160 = vpop.permute.xlu0 %159
    %163 = vset.pattern.permute.xlu0 0
    %164 = vperm.xlu0 %163, %v116
    %v165 = vpop.permute.xlu0 %164
    %v167 = vperm.slane %v41, 0
    %v168 = vmul.f32 %v140, %v167
    %v169 = vmul.f32 %v145, %v167
    %v170 = vmul.f32 %v150, %v167
    %v171 = vmul.f32 %v155, %v167
    %v172 = vmul.f32 %v160, %v167
    %v173 = vmul.f32 %v165, %v167
    %v174 = vperm.slane %v42, 0
    %v175 = vadd.f32 %v168, %v174
    %v176 = vadd.f32 %v169, %v174
    %v177 = vadd.f32 %v170, %v174
    %v178 = vadd.f32 %v171, %v174
    %v179 = vadd.f32 %v172, %v174
    %v180 = vadd.f32 %v173, %v174
    %vm181 = vcmp.gt.f32.partialorder %v175, 0.0
    %vm182 = vcmp.gt.f32.partialorder %v176, 0.0
    %vm183 = vcmp.gt.f32.partialorder %v177, 0.0
    %vm184 = vcmp.gt.f32.partialorder %v178, 0.0
    %vm185 = vcmp.gt.f32.partialorder %v179, 0.0
    %vm186 = vcmp.gt.f32.partialorder %v180, 0.0
    %v187 = vmul.f32 %v175, 1.442695
    %v188 = vpow.pop %v187
    %v189 = vmul.f32 %v176, 1.442695
    %v190 = vpow.pop %v189
    %v191 = vmul.f32 %v177, 1.442695
    %v192 = vpow.pop %v191
    %v193 = vmul.f32 %v178, 1.442695
    %v194 = vpow.pop %v193
    %v195 = vmul.f32 %v179, 1.442695
    %v196 = vpow.pop %v195
    %v197 = vmul.f32 %v180, 1.442695
    %v198 = vpow.pop %v197
    %v199 = vsub.f32 %v188, 1.0
    %v200 = vsub.f32 %v190, 1.0
    %v201 = vsub.f32 %v192, 1.0
    %v202 = vsub.f32 %v194, 1.0
    %v203 = vsub.f32 %v196, 1.0
    %v204 = vsub.f32 %v198, 1.0
    %v205 = vsel %vm181, %v175, %v199
    %v206 = vsel %vm182, %v176, %v200
    %v207 = vsel %vm183, %v177, %v201
    %v208 = vsel %vm184, %v178, %v202
    %v209 = vsel %vm185, %v179, %v203
    %v210 = vsel %vm186, %v180, %v204
    %v211 = vpack.c.bf16 %v136, %v135
    %v218 = vunpack.c.l.b16 %v99
    %v219 = vunpack.c.l.b16 %v100
    %v220 = vunpack.c.l.b16 %v101
    %v221 = vunpack.c.l.b16 %v102
    %v222 = vunpack.c.l.b16 %v103
    %v223 = vunpack.c.l.b16 %v104
    %v224 = vpack.c.b16 %v219, %v218
    %v225 = vpack.c.b16 %v221, %v220
    %v226 = vpack.c.b16 %v223, %v222
    %vm227 = vcmask 130048
    %v229 = vsel %vm227, %v224, 0
    %v232 = vsel %vm227, %v225, 0
    %v235 = vsel %vm227, %v226, 0
    %237 = vmatpush.bf16.msra.mxu0 0
    %238 = vmatpush.bf16.msra.mxu0 0
    %239 = vmatpush.bf16.msra.mxu0 0
    %240 = vmatpush.bf16.msra.mxu0 0
    %241 = vmatpush.bf16.msra.mxu0 0
    %242 = vmatpush.bf16.msra.mxu0 0
    %243 = vmatpush.bf16.msra.mxu0 0
    %244 = vmatpush.bf16.msra.mxu0 %v211
    %245 = vmatmul.bf16.gmra.mxu0 %v229
    %v246 = vpop.f32.mrf.mxu0
    %v247 = vadd.f32 0.0, %v246
    %v248 = vpop.f32.mrf.mxu0
    %v249 = vadd.f32 0.0, %v248
    %250 = vmatmul.bf16.gmra.mxu0 %v232
    %v251 = vpop.f32.mrf.mxu0
    %v252 = vadd.f32 0.0, %v251
    %v253 = vpop.f32.mrf.mxu0
    %v254 = vadd.f32 0.0, %v253
    %255 = vmatmul.bf16.gmra.mxu0 %v235
    %v256 = vpop.f32.mrf.mxu0
    %v257 = vadd.f32 0.0, %v256
    %v258 = vpop.f32.mrf.mxu0
    %v259 = vadd.f32 0.0, %v258
    %260 = vdwg.mxu0
    %v261 = vmul.f32 %v205, %v247
    %v262 = vmul.f32 %v206, %v249
    %v263 = vmul.f32 %v207, %v252
    %v264 = vmul.f32 %v208, %v254
    %v265 = vmul.f32 %v209, %v257
    %v266 = vmul.f32 %v210, %v259
    %268 = vset.pattern.permute.xlu0 0
    %269 = vperm.xlu0 %268, %v129
    %v270 = vpop.permute.xlu0 %269
    %273 = vset.pattern.permute.xlu0 0
    %274 = vperm.xlu0 %273, %v130
    %v275 = vpop.permute.xlu0 %274
    %278 = vset.pattern.permute.xlu0 0
    %279 = vperm.xlu0 %278, %v131
    %v280 = vpop.permute.xlu0 %279
    %283 = vset.pattern.permute.xlu0 0
    %284 = vperm.xlu0 %283, %v132
    %v285 = vpop.permute.xlu0 %284
    %288 = vset.pattern.permute.xlu0 0
    %289 = vperm.xlu0 %288, %v133
    %v290 = vpop.permute.xlu0 %289
    %293 = vset.pattern.permute.xlu0 0
    %294 = vperm.xlu0 %293, %v134
    %v295 = vpop.permute.xlu0 %294
    %v297 = vmul.f32 %v261, %v270
    %v298 = vmul.f32 %v262, %v275
    %v299 = vmul.f32 %v263, %v280
    %v300 = vmul.f32 %v264, %v285
    %v301 = vmul.f32 %v265, %v290
    %v302 = vmul.f32 %v266, %v295
    %v303 = vpack.c.bf16 %v298, %v297
    %v304 = vpack.c.bf16 %v300, %v299
    %v305 = vpack.c.bf16 %v302, %v301
    %v312 = vunpack.c.l.b16 %v105
    %v313 = vunpack.c.l.b16 %v106
    %v314 = vunpack.c.l.b16 %v107
    %v315 = vunpack.c.l.b16 %v108
    %v316 = vunpack.c.l.b16 %v109
    %v317 = vunpack.c.l.b16 %v110
    %v318 = vpack.c.b16 %v313, %v312
    %v319 = vpack.c.b16 %v315, %v314
    %v320 = vpack.c.b16 %v317, %v316
    %324 = vxpose.xlu0.c.b16.start [1/8] %v318, 128
    %325 = vxpose.xlu0.c.b16.cont [2/8] %v319, 128
    %326 = vxpose.xlu0.c.b16.cont [3/8] %v320, 128
    %327 = vxpose.xlu0.c.b16.cont [4/8] 0, 128
    %328 = vxpose.xlu0.c.b16.cont [5/8] 0, 128
    %329 = vxpose.xlu0.c.b16.cont [6/8] 0, 128
    %330 = vxpose.xlu0.c.b16.cont [7/8] 0, 128
    %331 = vxpose.xlu0.c.b16.end [8/8] 0, 128
    %v332 = vpop.trf.xlu0
    %v333 = vpop.trf.xlu0
    %v334 = vpop.trf.xlu0
    %v335 = vpop.trf.xlu0
    %v336 = vpop.trf.xlu0
    %v337 = vpop.trf.xlu0
    %v338 = vpop.trf.xlu0
    %v339 = vpop.trf.xlu0
    %vm340 = vcmask 392192
    %v342 = vsel %vm340, %v332, 0
    %344 = vmatpush.bf16.msra.mxu0 0
    %345 = vmatpush.bf16.msra.mxu0 0
    %346 = vmatpush.bf16.msra.mxu0 0
    %347 = vmatpush.bf16.msra.mxu0 0
    %348 = vmatpush.bf16.msra.mxu0 0
    %349 = vmatpush.bf16.msra.mxu0 %v305
    %350 = vmatpush.bf16.msra.mxu0 %v304
    %351 = vmatpush.bf16.msra.mxu0 %v303
    %352 = vmatmul.bf16.gmra.mxu0 %v342
    %v353 = vpop.f32.mrf.mxu0
    %v354 = vadd.f32 0.0, %v353
    %v355 = vpop.f32.mrf.mxu0
    %v356 = vadd.f32 0.0, %v355
    %357 = vdwg.mxu0
    %v358 = vadd.f32 %v135, %v354
    %v359 = vadd.f32 %v136, %v356
    %v360 = vperm.slane %v44, 0
    %vm361 = vcmask 64512
    %v363 = vsel %vm361, %v358, 0
    %v366 = vsel %vm361, %v359, 0
    %368 = vmatpush.msra.mxu0 0.0
    %369 = vmatpush.msra.mxu0 0.0
    %370 = vmatpush.msra.mxu0 0.0
    %371 = vmatpush.msra.mxu0 0.0
    %372 = vmatpush.msra.mxu0 0.0
    %373 = vmatpush.msra.mxu0 0.0
    %374 = vmatpush.msra.mxu0 0.0
    %375 = vmatpush.msra.mxu0 0.0
    %376 = vmatpush.msra.mxu0 0.0
    %377 = vmatpush.msra.mxu0 0.0
    %378 = vmatpush.msra.mxu0 0.0
    %379 = vmatpush.msra.mxu0 0.0
    %380 = vmatpush.msra.mxu0 0.0
    %381 = vmatpush.msra.mxu0 0.0
    %382 = vmatpush.msra.mxu0 0.0
    %383 = vmatpush.msra.mxu0 %v43
    %384 = vmatmul.f32.gmra.mxu0 %v363
    %v385 = vpop.f32.mrf.mxu0
    %v386 = vadd.f32 %v360, %v385
    %387 = vmatmul.f32.gmra.mxu0 %v366
    %v388 = vpop.f32.mrf.mxu0
    %v389 = vadd.f32 %v360, %v388
    %390 = vdwg.mxu0
    %v391 = vsel %vm227, %v386, 0.0
    %v392 = vsel %vm227, %v389, 0.0
    %v393 = vadd.f32 %v391, %v392
    %v394 = vrot.slane %v393, 4
    %v395 = vadd.f32 %v393, %v394
    %v396 = vrot.slane %v395, 2
    %v397 = vadd.f32 %v395, %v396
    %v398 = vrot.slane %v397, 1
    %v399 = vadd.f32 %v397, %v398
    %v400 = vrcp.pop 16.0
    %v401 = vmul.f32 16.0, %v400
    %v402 = vsub.f32 1.0, %v401
    %v403 = vmul.f32 %v400, %v402
    %v404 = vadd.f32 %v400, %v403
    %vm405 = vweird.f32 %v400
    %v406 = vsel %vm405, %v400, %v404
    %v407 = vmul.f32 %v399, %v406
    %v408 = vsub.f32 %v386, %v407
    %v409 = vsub.f32 %v389, %v407
    %v410 = vmul.f32 %v408, %v408
    %v411 = vmul.f32 %v409, %v409
    %v412 = vsel %vm227, %v410, 0.0
    %v413 = vsel %vm227, %v411, 0.0
    %v414 = vadd.f32 %v412, %v413
    %v415 = vrot.slane %v414, 4
    %v416 = vadd.f32 %v414, %v415
    %v417 = vrot.slane %v416, 2
    %v418 = vadd.f32 %v416, %v417
    %v419 = vrot.slane %v418, 1
    %v420 = vadd.f32 %v418, %v419
    %v421 = vmul.f32 %v420, %v406
    %v422 = vadd.f32 %v421, 1e-05
    %v423 = vrsqrt.pop %v422
    %v424 = vmul.f32 %v423, %v422
    %v425 = vmul.f32 %v424, %v423
    %v426 = vmul.f32 0.5, %v425
    %v427 = vsub.f32 1.5, %v426
    %v428 = vmul.f32 %v423, %v427
    %vm429 = vweird.f32 %v422
    %vm430 = vweird.f32 %v423
    %vm431 = vmor %vm429, %vm430
    %v432 = vsel %vm431, %v423, %v428
    %v433 = vmul.f32 %v408, %v432
    %v434 = vmul.f32 %v409, %v432
    %v435 = vperm.slane %v45, 0
    %v436 = vmul.f32 %v433, %v435
    %v437 = vmul.f32 %v434, %v435
    %v438 = vperm.slane %v46, 0
    %v439 = vadd.f32 %v436, %v438
    %v440 = vadd.f32 %v437, %v438
    %v441 = vperm.slane %v47, 0
    %v442 = vmul.f32 %v140, %v441
    %v443 = vmul.f32 %v145, %v441
    %v444 = vmul.f32 %v150, %v441
    %v445 = vmul.f32 %v155, %v441
    %v446 = vmul.f32 %v160, %v441
    %v447 = vmul.f32 %v165, %v441
    %v448 = vperm.slane %v48, 0
    %v449 = vadd.f32 %v442, %v448
    %v450 = vadd.f32 %v443, %v448
    %v451 = vadd.f32 %v444, %v448
    %v452 = vadd.f32 %v445, %v448
    %v453 = vadd.f32 %v446, %v448
    %v454 = vadd.f32 %v447, %v448
    %vm455 = vcmp.gt.f32.partialorder %v449, 0.0
    %vm456 = vcmp.gt.f32.partialorder %v450, 0.0
    %vm457 = vcmp.gt.f32.partialorder %v451, 0.0
    %vm458 = vcmp.gt.f32.partialorder %v452, 0.0
    %vm459 = vcmp.gt.f32.partialorder %v453, 0.0
    %vm460 = vcmp.gt.f32.partialorder %v454, 0.0
    %v461 = vmul.f32 %v449, 1.442695
    %v462 = vpow.pop %v461
    %v463 = vmul.f32 %v450, 1.442695
    %v464 = vpow.pop %v463
    %v465 = vmul.f32 %v451, 1.442695
    %v466 = vpow.pop %v465
    %v467 = vmul.f32 %v452, 1.442695
    %v468 = vpow.pop %v467
    %v469 = vmul.f32 %v453, 1.442695
    %v470 = vpow.pop %v469
    %v471 = vmul.f32 %v454, 1.442695
    %v472 = vpow.pop %v471
    %v473 = vsub.f32 %v462, 1.0
    %v474 = vsub.f32 %v464, 1.0
    %v475 = vsub.f32 %v466, 1.0
    %v476 = vsub.f32 %v468, 1.0
    %v477 = vsub.f32 %v470, 1.0
    %v478 = vsub.f32 %v472, 1.0
    %v479 = vsel %vm455, %v449, %v473
    %v480 = vsel %vm456, %v450, %v474
    %v481 = vsel %vm457, %v451, %v475
    %v482 = vsel %vm458, %v452, %v476
    %v483 = vsel %vm459, %v453, %v477
    %v484 = vsel %vm460, %v454, %v478
    %v485 = vpack.c.bf16 %v440, %v439
    %486 = vmatpush.bf16.msra.mxu0 0
    %487 = vmatpush.bf16.msra.mxu0 0
    %488 = vmatpush.bf16.msra.mxu0 0
    %489 = vmatpush.bf16.msra.mxu0 0
    %490 = vmatpush.bf16.msra.mxu0 0
    %491 = vmatpush.bf16.msra.mxu0 0
    %492 = vmatpush.bf16.msra.mxu0 0
    %493 = vmatpush.bf16.msra.mxu0 %v485
    %494 = vmatmul.bf16.gmra.mxu0 %v229
    %v495 = vpop.f32.mrf.mxu0
    %v496 = vadd.f32 0.0, %v495
    %v497 = vpop.f32.mrf.mxu0
    %v498 = vadd.f32 0.0, %v497
    %499 = vmatmul.bf16.gmra.mxu0 %v232
    %v500 = vpop.f32.mrf.mxu0
    %v501 = vadd.f32 0.0, %v500
    %v502 = vpop.f32.mrf.mxu0
    %v503 = vadd.f32 0.0, %v502
    %504 = vmatmul.bf16.gmra.mxu0 %v235
    %v505 = vpop.f32.mrf.mxu0
    %v506 = vadd.f32 0.0, %v505
    %v507 = vpop.f32.mrf.mxu0
    %v508 = vadd.f32 0.0, %v507
    %509 = vdwg.mxu0
    %v510 = vmul.f32 %v479, %v496
    %v511 = vmul.f32 %v480, %v498
    %v512 = vmul.f32 %v481, %v501
    %v513 = vmul.f32 %v482, %v503
    %v514 = vmul.f32 %v483, %v506
    %v515 = vmul.f32 %v484, %v508
    %v516 = vmul.f32 %v510, %v270
    %v517 = vmul.f32 %v511, %v275
    %v518 = vmul.f32 %v512, %v280
    %v519 = vmul.f32 %v513, %v285
    %v520 = vmul.f32 %v514, %v290
    %v521 = vmul.f32 %v515, %v295
    %v522 = vpack.c.bf16 %v517, %v516
    %v523 = vpack.c.bf16 %v519, %v518
    %v524 = vpack.c.bf16 %v521, %v520
    %525 = vmatpush.bf16.msra.mxu0 0
    %526 = vmatpush.bf16.msra.mxu0 0
    %527 = vmatpush.bf16.msra.mxu0 0
    %528 = vmatpush.bf16.msra.mxu0 0
    %529 = vmatpush.bf16.msra.mxu0 0
    %530 = vmatpush.bf16.msra.mxu0 %v524
    %531 = vmatpush.bf16.msra.mxu0 %v523
    %532 = vmatpush.bf16.msra.mxu0 %v522
    %533 = vmatmul.bf16.gmra.mxu0 %v342
    %v534 = vpop.f32.mrf.mxu0
    %v535 = vadd.f32 0.0, %v534
    %v536 = vpop.f32.mrf.mxu0
    %v537 = vadd.f32 0.0, %v536
    %538 = vdwg.mxu0
    %v539 = vadd.f32 %v439, %v535
    %v540 = vadd.f32 %v440, %v537
    %v541 = vperm.slane %v51, 0
    %v543 = vsel %vm227, %v539, 0
    %v546 = vsel %vm227, %v540, 0
    %548 = vmatpush.msra.mxu0 0.0
    %549 = vmatpush.msra.mxu0 0.0
    %550 = vmatpush.msra.mxu0 0.0
    %551 = vmatpush.msra.mxu0 0.0
    %552 = vmatpush.msra.mxu0 0.0
    %553 = vmatpush.msra.mxu0 0.0
    %554 = vmatpush.msra.mxu0 0.0
    %555 = vmatpush.msra.mxu0 0.0
    %556 = vmatpush.msra.mxu0 0.0
    %557 = vmatpush.msra.mxu0 0.0
    %558 = vmatpush.msra.mxu0 0.0
    %559 = vmatpush.msra.mxu0 0.0
    %560 = vmatpush.msra.mxu0 0.0
    %561 = vmatpush.msra.mxu0 0.0
    %562 = vmatpush.msra.mxu0 %v50
    %563 = vmatpush.msra.mxu0 %v49
    %564 = vmatmul.f32.gmra.mxu0 %v543
    %v565 = vpop.f32.mrf.mxu0
    %v566 = vadd.f32 %v541, %v565
    %567 = vmatmul.f32.gmra.mxu0 %v546
    %v568 = vpop.f32.mrf.mxu0
    %v569 = vadd.f32 %v541, %v568
    %570 = vdwg.mxu0
    %v571 = vsel %vm227, %v566, 0.0
    %v572 = vsel %vm227, %v569, 0.0
    %v573 = vadd.f32 %v571, %v572
    %v574 = vrot.slane %v573, 4
    %v575 = vadd.f32 %v573, %v574
    %v576 = vrot.slane %v575, 2
    %v577 = vadd.f32 %v575, %v576
    %v578 = vrot.slane %v577, 1
    %v579 = vadd.f32 %v577, %v578
    %v580 = vmul.f32 %v579, %v406
    %v581 = vsub.f32 %v566, %v580
    %v582 = vsub.f32 %v569, %v580
    %v583 = vmul.f32 %v581, %v581
    %v584 = vmul.f32 %v582, %v582
    %v585 = vsel %vm227, %v583, 0.0
    %v586 = vsel %vm227, %v584, 0.0
    %v587 = vadd.f32 %v585, %v586
    %v588 = vrot.slane %v587, 4
    %v589 = vadd.f32 %v587, %v588
    %v590 = vrot.slane %v589, 2
    %v591 = vadd.f32 %v589, %v590
    %v592 = vrot.slane %v591, 1
    %v593 = vadd.f32 %v591, %v592
    %v594 = vmul.f32 %v593, %v406
    %v595 = vadd.f32 %v594, 1e-05
    %v596 = vrsqrt.pop %v595
    %v597 = vmul.f32 %v596, %v595
    %v598 = vmul.f32 %v597, %v596
    %v599 = vmul.f32 0.5, %v598
    %v600 = vsub.f32 1.5, %v599
    %v601 = vmul.f32 %v596, %v600
    %vm602 = vweird.f32 %v595
    %vm603 = vweird.f32 %v596
    %vm604 = vmor %vm602, %vm603
    %v605 = vsel %vm604, %v596, %v601
    %v606 = vmul.f32 %v581, %v605
    %v607 = vmul.f32 %v582, %v605
    %v608 = vperm.slane %v52, 0
    %v609 = vmul.f32 %v606, %v608
    %v610 = vmul.f32 %v607, %v608
    %v611 = vperm.slane %v53, 0
    %v612 = vadd.f32 %v609, %v611
    %v613 = vadd.f32 %v610, %v611
    %v614 = vperm.slane %v54, 0
    %v615 = vmul.f32 %v140, %v614
    %v616 = vmul.f32 %v145, %v614
    %v617 = vmul.f32 %v150, %v614
    %v618 = vmul.f32 %v155, %v614
    %v619 = vmul.f32 %v160, %v614
    %v620 = vmul.f32 %v165, %v614
    %v621 = vperm.slane %v55, 0
    %v622 = vadd.f32 %v615, %v621
    %v623 = vadd.f32 %v616, %v621
    %v624 = vadd.f32 %v617, %v621
    %v625 = vadd.f32 %v618, %v621
    %v626 = vadd.f32 %v619, %v621
    %v627 = vadd.f32 %v620, %v621
    %vm628 = vcmp.gt.f32.partialorder %v622, 0.0
    %vm629 = vcmp.gt.f32.partialorder %v623, 0.0
    %vm630 = vcmp.gt.f32.partialorder %v624, 0.0
    %vm631 = vcmp.gt.f32.partialorder %v625, 0.0
    %vm632 = vcmp.gt.f32.partialorder %v626, 0.0
    %vm633 = vcmp.gt.f32.partialorder %v627, 0.0
    %v634 = vmul.f32 %v622, 1.442695
    %v635 = vpow.pop %v634
    %v636 = vmul.f32 %v623, 1.442695
    %v637 = vpow.pop %v636
    %v638 = vmul.f32 %v624, 1.442695
    %v639 = vpow.pop %v638
    %v640 = vmul.f32 %v625, 1.442695
    %v641 = vpow.pop %v640
    %v642 = vmul.f32 %v626, 1.442695
    %v643 = vpow.pop %v642
    %v644 = vmul.f32 %v627, 1.442695
    %v645 = vpow.pop %v644
    %v646 = vsub.f32 %v635, 1.0
    %v647 = vsub.f32 %v637, 1.0
    %v648 = vsub.f32 %v639, 1.0
    %v649 = vsub.f32 %v641, 1.0
    %v650 = vsub.f32 %v643, 1.0
    %v651 = vsub.f32 %v645, 1.0
    %v652 = vsel %vm628, %v622, %v646
    %v653 = vsel %vm629, %v623, %v647
    %v654 = vsel %vm630, %v624, %v648
    %v655 = vsel %vm631, %v625, %v649
    %v656 = vsel %vm632, %v626, %v650
    %v657 = vsel %vm633, %v627, %v651
    %v658 = vpack.c.bf16 %v613, %v612
    %659 = vmatpush.bf16.msra.mxu0 0
    %660 = vmatpush.bf16.msra.mxu0 0
    %661 = vmatpush.bf16.msra.mxu0 0
    %662 = vmatpush.bf16.msra.mxu0 0
    %663 = vmatpush.bf16.msra.mxu0 0
    %664 = vmatpush.bf16.msra.mxu0 0
    %665 = vmatpush.bf16.msra.mxu0 0
    %666 = vmatpush.bf16.msra.mxu0 %v658
    %667 = vmatmul.bf16.gmra.mxu0 %v229
    %v668 = vpop.f32.mrf.mxu0
    %v669 = vadd.f32 0.0, %v668
    %v670 = vpop.f32.mrf.mxu0
    %v671 = vadd.f32 0.0, %v670
    %672 = vmatmul.bf16.gmra.mxu0 %v232
    %v673 = vpop.f32.mrf.mxu0
    %v674 = vadd.f32 0.0, %v673
    %v675 = vpop.f32.mrf.mxu0
    %v676 = vadd.f32 0.0, %v675
    %677 = vmatmul.bf16.gmra.mxu0 %v235
    %v678 = vpop.f32.mrf.mxu0
    %v679 = vadd.f32 0.0, %v678
    %v680 = vpop.f32.mrf.mxu0
    %v681 = vadd.f32 0.0, %v680
    %682 = vdwg.mxu0
    %v683 = vmul.f32 %v652, %v669
    %v684 = vmul.f32 %v653, %v671
    %v685 = vmul.f32 %v654, %v674
    %v686 = vmul.f32 %v655, %v676
    %v687 = vmul.f32 %v656, %v679
    %v688 = vmul.f32 %v657, %v681
    %v689 = vmul.f32 %v683, %v270
    %v690 = vmul.f32 %v684, %v275
    %v691 = vmul.f32 %v685, %v280
    %v692 = vmul.f32 %v686, %v285
    %v693 = vmul.f32 %v687, %v290
    %v694 = vmul.f32 %v688, %v295
    %v695 = vpack.c.bf16 %v690, %v689
    %v696 = vpack.c.bf16 %v692, %v691
    %v697 = vpack.c.bf16 %v694, %v693
    %698 = vmatpush.bf16.msra.mxu0 0
    %699 = vmatpush.bf16.msra.mxu0 0
    %700 = vmatpush.bf16.msra.mxu0 0
    %701 = vmatpush.bf16.msra.mxu0 0
    %702 = vmatpush.bf16.msra.mxu0 0
    %703 = vmatpush.bf16.msra.mxu0 %v697
    %704 = vmatpush.bf16.msra.mxu0 %v696
    %705 = vmatpush.bf16.msra.mxu0 %v695
    %706 = vmatmul.bf16.gmra.mxu0 %v342
    %v707 = vpop.f32.mrf.mxu0
    %v708 = vadd.f32 0.0, %v707
    %v709 = vpop.f32.mrf.mxu0
    %v710 = vadd.f32 0.0, %v709
    %711 = vdwg.mxu0
    %v712 = vadd.f32 %v612, %v708
    %v713 = vadd.f32 %v613, %v710
    %v714 = vperm.slane %v58, 0
    %v716 = vsel %vm227, %v712, 0
    %v719 = vsel %vm227, %v713, 0
    %721 = vmatpush.msra.mxu0 0.0
    %722 = vmatpush.msra.mxu0 0.0
    %723 = vmatpush.msra.mxu0 0.0
    %724 = vmatpush.msra.mxu0 0.0
    %725 = vmatpush.msra.mxu0 0.0
    %726 = vmatpush.msra.mxu0 0.0
    %727 = vmatpush.msra.mxu0 0.0
    %728 = vmatpush.msra.mxu0 0.0
    %729 = vmatpush.msra.mxu0 0.0
    %730 = vmatpush.msra.mxu0 0.0
    %731 = vmatpush.msra.mxu0 0.0
    %732 = vmatpush.msra.mxu0 0.0
    %733 = vmatpush.msra.mxu0 0.0
    %734 = vmatpush.msra.mxu0 0.0
    %735 = vmatpush.msra.mxu0 %v57
    %736 = vmatpush.msra.mxu0 %v56
    %737 = vmatmul.f32.gmra.mxu0 %v716
    %v738 = vpop.f32.mrf.mxu0
    %v739 = vadd.f32 %v714, %v738
    %740 = vmatmul.f32.gmra.mxu0 %v719
    %v741 = vpop.f32.mrf.mxu0
    %v742 = vadd.f32 %v714, %v741
    %743 = vdwg.mxu0
    %v744 = vsel %vm227, %v739, 0.0
    %v745 = vsel %vm227, %v742, 0.0
    %v746 = vadd.f32 %v744, %v745
    %v747 = vrot.slane %v746, 4
    %v748 = vadd.f32 %v746, %v747
    %v749 = vrot.slane %v748, 2
    %v750 = vadd.f32 %v748, %v749
    %v751 = vrot.slane %v750, 1
    %v752 = vadd.f32 %v750, %v751
    %v753 = vmul.f32 %v752, %v406
    %v754 = vsub.f32 %v739, %v753
    %v755 = vsub.f32 %v742, %v753
    %v756 = vmul.f32 %v754, %v754
    %v757 = vmul.f32 %v755, %v755
    %v758 = vsel %vm227, %v756, 0.0
    %v759 = vsel %vm227, %v757, 0.0
    %v760 = vadd.f32 %v758, %v759
    %v761 = vrot.slane %v760, 4
    %v762 = vadd.f32 %v760, %v761
    %v763 = vrot.slane %v762, 2
    %v764 = vadd.f32 %v762, %v763
    %v765 = vrot.slane %v764, 1
    %v766 = vadd.f32 %v764, %v765
    %v767 = vmul.f32 %v766, %v406
    %v768 = vadd.f32 %v767, 1e-05
    %v769 = vrsqrt.pop %v768
    %v770 = vmul.f32 %v769, %v768
    %v771 = vmul.f32 %v770, %v769
    %v772 = vmul.f32 0.5, %v771
    %v773 = vsub.f32 1.5, %v772
    %v774 = vmul.f32 %v769, %v773
    %vm775 = vweird.f32 %v768
    %vm776 = vweird.f32 %v769
    %vm777 = vmor %vm775, %vm776
    %v778 = vsel %vm777, %v769, %v774
    %v779 = vmul.f32 %v754, %v778
    %v780 = vmul.f32 %v755, %v778
    %v781 = vperm.slane %v59, 0
    %v782 = vmul.f32 %v779, %v781
    %v783 = vmul.f32 %v780, %v781
    %v784 = vperm.slane %v60, 0
    %v785 = vadd.f32 %v782, %v784
    %v786 = vadd.f32 %v783, %v784
    %v787 = vpack.c.bf16 %v786, %v785
    %v789 = vsel %vm227, %v318, 0
    %v792 = vsel %vm227, %v319, 0
    %v795 = vsel %vm227, %v320, 0
    %797 = vmatpush.bf16.msra.mxu0 0
    %798 = vmatpush.bf16.msra.mxu0 0
    %799 = vmatpush.bf16.msra.mxu0 0
    %800 = vmatpush.bf16.msra.mxu0 0
    %801 = vmatpush.bf16.msra.mxu0 0
    %802 = vmatpush.bf16.msra.mxu0 0
    %803 = vmatpush.bf16.msra.mxu0 0
    %804 = vmatpush.bf16.msra.mxu0 %v787
    %805 = vmatmul.bf16.gmra.mxu0 %v789
    %v806 = vpop.f32.mrf.mxu0
    %v807 = vadd.f32 0.0, %v806
    %v808 = vpop.f32.mrf.mxu0
    %v809 = vadd.f32 0.0, %v808
    %810 = vmatmul.bf16.gmra.mxu0 %v792
    %v811 = vpop.f32.mrf.mxu0
    %v812 = vadd.f32 0.0, %v811
    %v813 = vpop.f32.mrf.mxu0
    %v814 = vadd.f32 0.0, %v813
    %815 = vmatmul.bf16.gmra.mxu0 %v795
    %v816 = vpop.f32.mrf.mxu0
    %v817 = vadd.f32 0.0, %v816
    %v818 = vpop.f32.mrf.mxu0
    %v819 = vadd.f32 0.0, %v818
    %820 = vdwg.mxu0
    %821 = vmatpush.bf16.msra.mxu0 0
    %822 = vmatpush.bf16.msra.mxu0 0
    %823 = vmatpush.bf16.msra.mxu0 0
    %824 = vmatpush.bf16.msra.mxu0 0
    %825 = vmatpush.bf16.msra.mxu0 0
    %826 = vmatpush.bf16.msra.mxu0 0
    %827 = vmatpush.bf16.msra.mxu0 0
    %828 = vmatpush.bf16.msra.mxu0 %v787
    %829 = vmatmul.bf16.gmra.mxu0 %v229
    %v830 = vpop.f32.mrf.mxu0
    %v831 = vadd.f32 0.0, %v830
    %v832 = vpop.f32.mrf.mxu0
    %v833 = vadd.f32 0.0, %v832
    %834 = vmatmul.bf16.gmra.mxu0 %v232
    %v835 = vpop.f32.mrf.mxu0
    %v836 = vadd.f32 0.0, %v835
    %v837 = vpop.f32.mrf.mxu0
    %v838 = vadd.f32 0.0, %v837
    %839 = vmatmul.bf16.gmra.mxu0 %v235
    %v840 = vpop.f32.mrf.mxu0
    %v841 = vadd.f32 0.0, %v840
    %v842 = vpop.f32.mrf.mxu0
    %v843 = vadd.f32 0.0, %v842
    %844 = vdwg.mxu0
    %v846 = vsel %vm227, %v807, 0
    %v849 = vsel %vm227, %v809, 0
    %v852 = vsel %vm227, %v812, 0
    %v855 = vsel %vm227, %v814, 0
    %v858 = vsel %vm227, %v817, 0
    %v861 = vsel %vm227, %v819, 0
    %863 = vmatpush.msra.mxu0 0.0
    %864 = vmatpush.msra.mxu0 0.0
    %865 = vmatpush.msra.mxu0 0.0
    %866 = vmatpush.msra.mxu0 0.0
    %867 = vmatpush.msra.mxu0 0.0
    %868 = vmatpush.msra.mxu0 0.0
    %869 = vmatpush.msra.mxu0 0.0
    %870 = vmatpush.msra.mxu0 0.0
    %871 = vmatpush.msra.mxu0 0.0
    %872 = vmatpush.msra.mxu0 0.0
    %873 = vmatpush.msra.mxu0 0.0
    %874 = vmatpush.msra.mxu0 0.0
    %875 = vmatpush.msra.mxu0 0.0
    %876 = vmatpush.msra.mxu0 0.0
    %877 = vmatpush.msra.mxu0 %v62
    %878 = vmatpush.msra.mxu0 %v61
    %879 = vmatmul.f32.gmra.mxu0 %v846
    %v880 = vpop.f32.mrf.mxu0
    %v881 = vadd.f32 0.0, %v880
    %882 = vmatmul.f32.gmra.mxu0 %v849
    %v883 = vpop.f32.mrf.mxu0
    %v884 = vadd.f32 0.0, %v883
    %885 = vmatmul.f32.gmra.mxu0 %v852
    %v886 = vpop.f32.mrf.mxu0
    %v887 = vadd.f32 0.0, %v886
    %888 = vmatmul.f32.gmra.mxu0 %v855
    %v889 = vpop.f32.mrf.mxu0
    %v890 = vadd.f32 0.0, %v889
    %891 = vmatmul.f32.gmra.mxu0 %v858
    %v892 = vpop.f32.mrf.mxu0
    %v893 = vadd.f32 0.0, %v892
    %894 = vmatmul.f32.gmra.mxu0 %v861
    %v895 = vpop.f32.mrf.mxu0
    %v896 = vadd.f32 0.0, %v895
    %897 = vdwg.mxu0
    %v899 = vsel %vm227, %v831, 0
    %v902 = vsel %vm227, %v833, 0
    %v905 = vsel %vm227, %v836, 0
    %v908 = vsel %vm227, %v838, 0
    %v911 = vsel %vm227, %v841, 0
    %v914 = vsel %vm227, %v843, 0
    %916 = vmatpush.msra.mxu0 0.0
    %917 = vmatpush.msra.mxu0 0.0
    %918 = vmatpush.msra.mxu0 0.0
    %919 = vmatpush.msra.mxu0 0.0
    %920 = vmatpush.msra.mxu0 0.0
    %921 = vmatpush.msra.mxu0 0.0
    %922 = vmatpush.msra.mxu0 0.0
    %923 = vmatpush.msra.mxu0 0.0
    %924 = vmatpush.msra.mxu0 0.0
    %925 = vmatpush.msra.mxu0 0.0
    %926 = vmatpush.msra.mxu0 0.0
    %927 = vmatpush.msra.mxu0 0.0
    %928 = vmatpush.msra.mxu0 0.0
    %929 = vmatpush.msra.mxu0 0.0
    %930 = vmatpush.msra.mxu0 %v64
    %931 = vmatpush.msra.mxu0 %v63
    %932 = vmatmul.f32.gmra.mxu0 %v899
    %v933 = vpop.f32.mrf.mxu0
    %v934 = vadd.f32 0.0, %v933
    %935 = vmatmul.f32.gmra.mxu0 %v902
    %v936 = vpop.f32.mrf.mxu0
    %v937 = vadd.f32 0.0, %v936
    %938 = vmatmul.f32.gmra.mxu0 %v905
    %v939 = vpop.f32.mrf.mxu0
    %v940 = vadd.f32 0.0, %v939
    %941 = vmatmul.f32.gmra.mxu0 %v908
    %v942 = vpop.f32.mrf.mxu0
    %v943 = vadd.f32 0.0, %v942
    %944 = vmatmul.f32.gmra.mxu0 %v911
    %v945 = vpop.f32.mrf.mxu0
    %v946 = vadd.f32 0.0, %v945
    %947 = vmatmul.f32.gmra.mxu0 %v914
    %v948 = vpop.f32.mrf.mxu0
    %v949 = vadd.f32 0.0, %v948
    %950 = vdwg.mxu0
    %v951 = vadd.f32 %v881, %v934
    %v952 = vadd.f32 %v884, %v937
    %v953 = vadd.f32 %v887, %v940
    %v954 = vadd.f32 %v890, %v943
    %v955 = vadd.f32 %v893, %v946
    %v956 = vadd.f32 %v896, %v949
    %v957 = vperm.slane %v65, 0
    %v958 = vmul.f32 %v140, %v957
    %v959 = vmul.f32 %v145, %v957
    %v960 = vmul.f32 %v150, %v957
    %v961 = vmul.f32 %v155, %v957
    %v962 = vmul.f32 %v160, %v957
    %v963 = vmul.f32 %v165, %v957
    %v964 = vadd.f32 %v951, %v958
    %v965 = vadd.f32 %v952, %v959
    %v966 = vadd.f32 %v953, %v960
    %v967 = vadd.f32 %v954, %v961
    %v968 = vadd.f32 %v955, %v962
    %v969 = vadd.f32 %v956, %v963
    %v970 = vperm.slane %v66, 0
    %v971 = vadd.f32 %v964, %v970
    %v972 = vadd.f32 %v965, %v970
    %v973 = vadd.f32 %v966, %v970
    %v974 = vadd.f32 %v967, %v970
    %v975 = vadd.f32 %v968, %v970
    %v976 = vadd.f32 %v969, %v970
    %vm977 = vcmp.gt.f32.partialorder %v971, 0.0
    %vm978 = vcmp.gt.f32.partialorder %v972, 0.0
    %vm979 = vcmp.gt.f32.partialorder %v973, 0.0
    %vm980 = vcmp.gt.f32.partialorder %v974, 0.0
    %vm981 = vcmp.gt.f32.partialorder %v975, 0.0
    %vm982 = vcmp.gt.f32.partialorder %v976, 0.0
    %v983 = vmul.f32 %v971, 1.442695
    %v984 = vpow.pop %v983
    %v985 = vmul.f32 %v972, 1.442695
    %v986 = vpow.pop %v985
    %v987 = vmul.f32 %v973, 1.442695
    %v988 = vpow.pop %v987
    %v989 = vmul.f32 %v974, 1.442695
    %v990 = vpow.pop %v989
    %v991 = vmul.f32 %v975, 1.442695
    %v992 = vpow.pop %v991
    %v993 = vmul.f32 %v976, 1.442695
    %v994 = vpow.pop %v993
    %v995 = vsub.f32 %v984, 1.0
    %v996 = vsub.f32 %v986, 1.0
    %v997 = vsub.f32 %v988, 1.0
    %v998 = vsub.f32 %v990, 1.0
    %v999 = vsub.f32 %v992, 1.0
    %v1000 = vsub.f32 %v994, 1.0
    %v1001 = vsel %vm977, %v971, %v995
    %v1002 = vsel %vm978, %v972, %v996
    %v1003 = vsel %vm979, %v973, %v997
    %v1004 = vsel %vm980, %v974, %v998
    %v1005 = vsel %vm981, %v975, %v999
    %v1006 = vsel %vm982, %v976, %v1000
    %v1007 = vmul.f32 %v1001, %v270
    %v1008 = vmul.f32 %v1002, %v275
    %v1009 = vmul.f32 %v1003, %v280
    %v1010 = vmul.f32 %v1004, %v285
    %v1011 = vmul.f32 %v1005, %v290
    %v1012 = vmul.f32 %v1006, %v295
    %v1014 = vsel %vm340, %v1007, 0
    %v1017 = vsel %vm340, %v1008, 0
    %v1020 = vsel %vm340, %v1009, 0
    %v1023 = vsel %vm340, %v1010, 0
    %v1026 = vsel %vm340, %v1011, 0
    %v1029 = vsel %vm340, %v1012, 0
    %1031 = vmatpush.msra.mxu0 0.0
    %1032 = vmatpush.msra.mxu0 0.0
    %1033 = vmatpush.msra.mxu0 0.0
    %1034 = vmatpush.msra.mxu0 0.0
    %1035 = vmatpush.msra.mxu0 0.0
    %1036 = vmatpush.msra.mxu0 0.0
    %1037 = vmatpush.msra.mxu0 0.0
    %1038 = vmatpush.msra.mxu0 0.0
    %1039 = vmatpush.msra.mxu0 0.0
    %1040 = vmatpush.msra.mxu0 0.0
    %1041 = vmatpush.msra.mxu0 %v72
    %1042 = vmatpush.msra.mxu0 %v71
    %1043 = vmatpush.msra.mxu0 %v70
    %1044 = vmatpush.msra.mxu0 %v69
    %1045 = vmatpush.msra.mxu0 %v68
    %1046 = vmatpush.msra.mxu0 %v67
    %1047 = vmatmul.f32.gmra.mxu0 %v1014
    %v1048 = vpop.f32.mrf.mxu0
    %v1049 = vadd.f32 0.0, %v1048
    %1050 = vmatmul.f32.gmra.mxu0 %v1017
    %v1051 = vpop.f32.mrf.mxu0
    %v1052 = vadd.f32 0.0, %v1051
    %1053 = vmatmul.f32.gmra.mxu0 %v1020
    %v1054 = vpop.f32.mrf.mxu0
    %v1055 = vadd.f32 0.0, %v1054
    %1056 = vmatmul.f32.gmra.mxu0 %v1023
    %v1057 = vpop.f32.mrf.mxu0
    %v1058 = vadd.f32 0.0, %v1057
    %1059 = vmatmul.f32.gmra.mxu0 %v1026
    %v1060 = vpop.f32.mrf.mxu0
    %v1061 = vadd.f32 0.0, %v1060
    %1062 = vmatmul.f32.gmra.mxu0 %v1029
    %v1063 = vpop.f32.mrf.mxu0
    %v1064 = vadd.f32 0.0, %v1063
    %1065 = vdwg.mxu0
    %1072 = vrot.lane.b32.xlu0 %v1049, 48
    %v1073 = vpop.permute.xlu0 %1072
    %1074 = vrot.lane.b32.xlu0 %v1052, 48
    %v1075 = vpop.permute.xlu0 %1074
    %1076 = vrot.lane.b32.xlu0 %v1055, 48
    %v1077 = vpop.permute.xlu0 %1076
    %1078 = vrot.lane.b32.xlu0 %v1058, 48
    %v1079 = vpop.permute.xlu0 %1078
    %1080 = vrot.lane.b32.xlu0 %v1061, 48
    %v1081 = vpop.permute.xlu0 %1080
    %1082 = vrot.lane.b32.xlu0 %v1064, 48
    %v1083 = vpop.permute.xlu0 %1082
    %v1090 = vmul.f32 %v881, %v1073
    %v1091 = vmul.f32 %v884, %v1075
    %v1092 = vmul.f32 %v887, %v1077
    %v1093 = vmul.f32 %v890, %v1079
    %v1094 = vmul.f32 %v893, %v1081
    %v1095 = vmul.f32 %v896, %v1083
    %1102 = vrot.lane.b32.xlu0 %v1090, 80
    %v1103 = vpop.permute.xlu0 %1102
    %1104 = vrot.lane.b32.xlu0 %v1091, 80
    %v1105 = vpop.permute.xlu0 %1104
    %1106 = vrot.lane.b32.xlu0 %v1092, 80
    %v1107 = vpop.permute.xlu0 %1106
    %1108 = vrot.lane.b32.xlu0 %v1093, 80
    %v1109 = vpop.permute.xlu0 %1108
    %1110 = vrot.lane.b32.xlu0 %v1094, 80
    %v1111 = vpop.permute.xlu0 %1110
    %1112 = vrot.lane.b32.xlu0 %v1095, 80
    %v1113 = vpop.permute.xlu0 %1112
    %v1114 = vsel %vm340, %v1103, 0
    %v1116 = vsel %vm340, %v1105, 0
    %v1118 = vsel %vm340, %v1107, 0
    %v1120 = vsel %vm340, %v1109, 0
    %v1122 = vsel %vm340, %v1111, 0
    %v1124 = vsel %vm340, %v1113, 0
    %1126 = vmatpush.msra.mxu0 0.0
    %1127 = vmatpush.msra.mxu0 0.0
    %1128 = vmatpush.msra.mxu0 0.0
    %1129 = vmatpush.msra.mxu0 0.0
    %1130 = vmatpush.msra.mxu0 0.0
    %1131 = vmatpush.msra.mxu0 0.0
    %1132 = vmatpush.msra.mxu0 0.0
    %1133 = vmatpush.msra.mxu0 0.0
    %1134 = vmatpush.msra.mxu0 0.0
    %1135 = vmatpush.msra.mxu0 0.0
    %1136 = vmatpush.msra.mxu0 %v78
    %1137 = vmatpush.msra.mxu0 %v77
    %1138 = vmatpush.msra.mxu0 %v76
    %1139 = vmatpush.msra.mxu0 %v75
    %1140 = vmatpush.msra.mxu0 %v74
    %1141 = vmatpush.msra.mxu0 %v73
    %1142 = vmatmul.f32.gmra.mxu0 %v1114
    %v1143 = vpop.f32.mrf.mxu0
    %v1144 = vadd.f32 0.0, %v1143
    %1145 = vmatmul.f32.gmra.mxu0 %v1116
    %v1146 = vpop.f32.mrf.mxu0
    %v1147 = vadd.f32 0.0, %v1146
    %1148 = vmatmul.f32.gmra.mxu0 %v1118
    %v1149 = vpop.f32.mrf.mxu0
    %v1150 = vadd.f32 0.0, %v1149
    %1151 = vmatmul.f32.gmra.mxu0 %v1120
    %v1152 = vpop.f32.mrf.mxu0
    %v1153 = vadd.f32 0.0, %v1152
    %1154 = vmatmul.f32.gmra.mxu0 %v1122
    %v1155 = vpop.f32.mrf.mxu0
    %v1156 = vadd.f32 0.0, %v1155
    %1157 = vmatmul.f32.gmra.mxu0 %v1124
    %v1158 = vpop.f32.mrf.mxu0
    %v1159 = vadd.f32 0.0, %v1158
    %1160 = vdwg.mxu0
    %v1161 = vtanh.pop %v1144
    %v1162 = vtanh.pop %v1147
    %v1163 = vtanh.pop %v1150
    %v1164 = vtanh.pop %v1153
    %v1165 = vtanh.pop %v1156
    %v1166 = vtanh.pop %v1159
    %v1167 = vpack.c.bf16 %v1162, %v1161
    %v1168 = vpack.c.bf16 %v1164, %v1163
    %v1169 = vpack.c.bf16 %v1166, %v1165
    %1170 = vmatpush.bf16.msra.mxu0 0
    %1171 = vmatpush.bf16.msra.mxu0 0
    %1172 = vmatpush.bf16.msra.mxu0 0
    %1173 = vmatpush.bf16.msra.mxu0 0
    %1174 = vmatpush.bf16.msra.mxu0 0
    %1175 = vmatpush.bf16.msra.mxu0 %v1169
    %1176 = vmatpush.bf16.msra.mxu0 %v1168
    %1177 = vmatpush.bf16.msra.mxu0 %v1167
    %1178 = vmatmul.bf16.gmra.mxu0 %v342
    %v1179 = vpop.f32.mrf.mxu0
    %v1180 = vadd.f32 0.0, %v1179
    %v1181 = vpop.f32.mrf.mxu0
    %v1182 = vadd.f32 0.0, %v1181
    %1183 = vdwg.mxu0
    %v1184 = vpack.c.bf16 %v1182, %v1180
    %1185 = vmatpush.bf16.msra.mxu0 0
    %1186 = vmatpush.bf16.msra.mxu0 0
    %1187 = vmatpush.bf16.msra.mxu0 0
    %1188 = vmatpush.bf16.msra.mxu0 0
    %1189 = vmatpush.bf16.msra.mxu0 0
    %1190 = vmatpush.bf16.msra.mxu0 0
    %1191 = vmatpush.bf16.msra.mxu0 0
    %1192 = vmatpush.bf16.msra.mxu0 %v1184
    %1193 = vmatmul.bf16.gmra.mxu0 %v789
    %v1194 = vpop.f32.mrf.mxu0
    %v1195 = vadd.f32 0.0, %v1194
    %v1196 = vpop.f32.mrf.mxu0
    %v1197 = vadd.f32 0.0, %v1196
    %1198 = vmatmul.bf16.gmra.mxu0 %v792
    %v1199 = vpop.f32.mrf.mxu0
    %v1200 = vadd.f32 0.0, %v1199
    %v1201 = vpop.f32.mrf.mxu0
    %v1202 = vadd.f32 0.0, %v1201
    %1203 = vmatmul.bf16.gmra.mxu0 %v795
    %v1204 = vpop.f32.mrf.mxu0
    %v1205 = vadd.f32 0.0, %v1204
    %v1206 = vpop.f32.mrf.mxu0
    %v1207 = vadd.f32 0.0, %v1206
    %1208 = vdwg.mxu0
    %v1209 = vsub.f32 %v1161, %v1195
    %v1210 = vsub.f32 %v1162, %v1197
    %v1211 = vsub.f32 %v1163, %v1200
    %v1212 = vsub.f32 %v1164, %v1202
    %v1213 = vsub.f32 %v1165, %v1205
    %v1214 = vsub.f32 %v1166, %v1207
    %v1215 = vmul.f32 %v1209, 1.442695
    %v1216 = vpow.pop %v1215
    %v1217 = vmul.f32 %v1210, 1.442695
    %v1218 = vpow.pop %v1217
    %v1219 = vmul.f32 %v1211, 1.442695
    %v1220 = vpow.pop %v1219
    %v1221 = vmul.f32 %v1212, 1.442695
    %v1222 = vpow.pop %v1221
    %v1223 = vmul.f32 %v1213, 1.442695
    %v1224 = vpow.pop %v1223
    %v1225 = vmul.f32 %v1214, 1.442695
    %v1226 = vpow.pop %v1225
    %v1227 = vmul.f32 %v1216, %v1007
    %v1228 = vmul.f32 %v1218, %v1008
    %v1229 = vmul.f32 %v1220, %v1009
    %v1230 = vmul.f32 %v1222, %v1010
    %v1231 = vmul.f32 %v1224, %v1011
    %v1232 = vmul.f32 %v1226, %v1012
    %v1233 = vpack.c.bf16 %v1228, %v1227
    %v1234 = vpack.c.bf16 %v1230, %v1229
    %v1235 = vpack.c.bf16 %v1232, %v1231
    %1236 = vmatpush.bf16.msra.mxu0 0
    %1237 = vmatpush.bf16.msra.mxu0 0
    %1238 = vmatpush.bf16.msra.mxu0 0
    %1239 = vmatpush.bf16.msra.mxu0 0
    %1240 = vmatpush.bf16.msra.mxu0 0
    %1241 = vmatpush.bf16.msra.mxu0 %v1235
    %1242 = vmatpush.bf16.msra.mxu0 %v1234
    %1243 = vmatpush.bf16.msra.mxu0 %v1233
    %1244 = vmatmul.bf16.gmra.mxu0 %v342
    %v1245 = vpop.f32.mrf.mxu0
    %v1246 = vadd.f32 0.0, %v1245
    %v1247 = vpop.f32.mrf.mxu0
    %v1248 = vadd.f32 0.0, %v1247
    %1249 = vdwg.mxu0
    %1252 = vrot.lane.b32.xlu0 %v785, 16
    %v1253 = vpop.permute.xlu0 %1252
    %1254 = vrot.lane.b32.xlu0 %v786, 16
    %v1255 = vpop.permute.xlu0 %1254
    %1258 = vrot.lane.b32.xlu0 %v785, 32
    %v1259 = vpop.permute.xlu0 %1258
    %1260 = vrot.lane.b32.xlu0 %v786, 32
    %v1261 = vpop.permute.xlu0 %1260
    %v1264 = vsel %vm227, %v785, %v1253
    %v1265 = vsel %vm227, %v786, %v1255
    %vm1266 = vcmask 261120
    %v1267 = vsel %vm1266, %v1264, %v1259
    %v1268 = vsel %vm1266, %v1265, %v1261
    %v1269 = vadd.f32 %v1267, %v1246
    %v1270 = vadd.f32 %v1268, %v1248
    %v1271 = vperm.slane %v85, 0
    %v1273 = vsel %vm340, %v1269, 0
    %v1276 = vsel %vm340, %v1270, 0
    %1278 = vmatpush.msra.mxu0 0.0
    %1279 = vmatpush.msra.mxu0 0.0
    %1280 = vmatpush.msra.mxu0 0.0
    %1281 = vmatpush.msra.mxu0 0.0
    %1282 = vmatpush.msra.mxu0 0.0
    %1283 = vmatpush.msra.mxu0 0.0
    %1284 = vmatpush.msra.mxu0 0.0
    %1285 = vmatpush.msra.mxu0 0.0
    %1286 = vmatpush.msra.mxu0 0.0
    %1287 = vmatpush.msra.mxu0 0.0
    %1288 = vmatpush.msra.mxu0 %v84
    %1289 = vmatpush.msra.mxu0 %v83
    %1290 = vmatpush.msra.mxu0 %v82
    %1291 = vmatpush.msra.mxu0 %v81
    %1292 = vmatpush.msra.mxu0 %v80
    %1293 = vmatpush.msra.mxu0 %v79
    %1294 = vmatmul.f32.gmra.mxu0 %v1273
    %v1295 = vpop.f32.mrf.mxu0
    %v1296 = vadd.f32 %v1271, %v1295
    %1297 = vmatmul.f32.gmra.mxu0 %v1276
    %v1298 = vpop.f32.mrf.mxu0
    %v1299 = vadd.f32 %v1271, %v1298
    %1300 = vdwg.mxu0
    %v1301 = vsel %vm340, %v1296, 0.0
    %v1302 = vsel %vm340, %v1299, 0.0
    %v1303 = vadd.f32 %v1301, %v1302
    %v1304 = vrot.slane %v1303, 4
    %v1305 = vadd.f32 %v1303, %v1304
    %v1306 = vrot.slane %v1305, 2
    %v1307 = vadd.f32 %v1305, %v1306
    %v1308 = vrot.slane %v1307, 1
    %v1309 = vadd.f32 %v1307, %v1308
    %v1310 = vmul.f32 %v1309, %v406
    %v1311 = vsub.f32 %v1296, %v1310
    %v1312 = vsub.f32 %v1299, %v1310
    %v1313 = vmul.f32 %v1311, %v1311
    %v1314 = vmul.f32 %v1312, %v1312
    %v1315 = vsel %vm340, %v1313, 0.0
    %v1316 = vsel %vm340, %v1314, 0.0
    %v1317 = vadd.f32 %v1315, %v1316
    %v1318 = vrot.slane %v1317, 4
    %v1319 = vadd.f32 %v1317, %v1318
    %v1320 = vrot.slane %v1319, 2
    %v1321 = vadd.f32 %v1319, %v1320
    %v1322 = vrot.slane %v1321, 1
    %v1323 = vadd.f32 %v1321, %v1322
    %v1324 = vmul.f32 %v1323, %v406
    %v1325 = vadd.f32 %v1324, 1e-05
    %v1326 = vrsqrt.pop %v1325
    %v1327 = vmul.f32 %v1326, %v1325
    %v1328 = vmul.f32 %v1327, %v1326
    %v1329 = vmul.f32 0.5, %v1328
    %v1330 = vsub.f32 1.5, %v1329
    %v1331 = vmul.f32 %v1326, %v1330
    %vm1332 = vweird.f32 %v1325
    %vm1333 = vweird.f32 %v1326
    %vm1334 = vmor %vm1332, %vm1333
    %v1335 = vsel %vm1334, %v1326, %v1331
    %v1336 = vmul.f32 %v1311, %v1335
    %v1337 = vmul.f32 %v1312, %v1335
    %v1338 = vperm.slane %v86, 0
    %v1339 = vmul.f32 %v1336, %v1338
    %v1340 = vmul.f32 %v1337, %v1338
    %v1341 = vperm.slane %v87, 0
    %v1342 = vadd.f32 %v1339, %v1341
    %v1343 = vadd.f32 %v1340, %v1341
    %v1344 = vld [vmem:[%s4] sm:$0x3]
    %v1346 = vsel %vm227, %v1344, 0
    %1348 = vmatpush.msra.mxu0 0.0
    %1349 = vmatpush.msra.mxu0 0.0
    %1350 = vmatpush.msra.mxu0 0.0
    %1351 = vmatpush.msra.mxu0 0.0
    %1352 = vmatpush.msra.mxu0 0.0
    %1353 = vmatpush.msra.mxu0 0.0
    %1354 = vmatpush.msra.mxu0 0.0
    %1355 = vmatpush.msra.mxu0 0.0
    %1356 = vmatpush.msra.mxu0 0.0
    %1357 = vmatpush.msra.mxu0 0.0
    %1358 = vmatpush.msra.mxu0 0.0
    %1359 = vmatpush.msra.mxu0 0.0
    %1360 = vmatpush.msra.mxu0 0.0
    %1361 = vmatpush.msra.mxu0 0.0
    %1362 = vmatpush.msra.mxu0 %v1343
    %1363 = vmatpush.msra.mxu0 %v1342
    %1364 = vmatmul.f32.gmra.mxu0 %v1346
    %v1365 = vpop.f32.mrf.mxu0
    %v1366 = vadd.f32 0.0, %v1365
    %1367 = vdwg.mxu0
    %v1368 = vperm.slane %v94, 0
    %v1370 = vsel %vm340, %v1366, 0
    %1372 = vmatpush.msra.mxu0 0.0
    %1373 = vmatpush.msra.mxu0 0.0
    %1374 = vmatpush.msra.mxu0 0.0
    %1375 = vmatpush.msra.mxu0 0.0
    %1376 = vmatpush.msra.mxu0 0.0
    %1377 = vmatpush.msra.mxu0 0.0
    %1378 = vmatpush.msra.mxu0 0.0
    %1379 = vmatpush.msra.mxu0 0.0
    %1380 = vmatpush.msra.mxu0 0.0
    %1381 = vmatpush.msra.mxu0 0.0
    %1382 = vmatpush.msra.mxu0 %v93
    %1383 = vmatpush.msra.mxu0 %v92
    %1384 = vmatpush.msra.mxu0 %v91
    %1385 = vmatpush.msra.mxu0 %v90
    %1386 = vmatpush.msra.mxu0 %v89
    %1387 = vmatpush.msra.mxu0 %v88
    %1388 = vmatmul.f32.gmra.mxu0 %v1370
    %v1389 = vpop.f32.mrf.mxu0
    %v1390 = vadd.f32 %v1368, %v1389
    %1391 = vdwg.mxu0
    %vm1392 = vcmp.ge.f32.partialorder %v1390, 0.0
    %s1394 = vtos %v95
    %v1395 = vstv %s1394
    %v1397 = vmul.f32 %v1395, %v1390
    %v1398 = vsel %vm1392, %v1390, %v1397
    %v1399 = vperm.slane %v98, 0
    %v1401 = vsel %vm227, %v1398, 0
    %1403 = vmatpush.msra.mxu0 0.0
    %1404 = vmatpush.msra.mxu0 0.0
    %1405 = vmatpush.msra.mxu0 0.0
    %1406 = vmatpush.msra.mxu0 0.0
    %1407 = vmatpush.msra.mxu0 0.0
    %1408 = vmatpush.msra.mxu0 0.0
    %1409 = vmatpush.msra.mxu0 0.0
    %1410 = vmatpush.msra.mxu0 0.0
    %1411 = vmatpush.msra.mxu0 0.0
    %1412 = vmatpush.msra.mxu0 0.0
    %1413 = vmatpush.msra.mxu0 0.0
    %1414 = vmatpush.msra.mxu0 0.0
    %1415 = vmatpush.msra.mxu0 0.0
    %1416 = vmatpush.msra.mxu0 0.0
    %1417 = vmatpush.msra.mxu0 %v97
    %1418 = vmatpush.msra.mxu0 %v96
    %1419 = vmatmul.f32.gmra.mxu0 %v1401
    %v1420 = vpop.f32.mrf.mxu0
    %v1421 = vadd.f32 %v1399, %v1420
    %1422 = vdwg.mxu0
    %vm1423 = vcmask 17408
    %1424 = vst.msk [vmem:[#allocation5] sm:$0x3] %vm1423, %v1421
    // Predicated region
    $region30: #{tpu_custom_call.1} parent=1 // pred_check
      _
    $region31: #{tpu_custom_call.1} parent=1 // pred_check_branch
      %1426 = sbr.rel (0) target = $region33
    $region32: #{tpu_custom_call.1} parent=1 // pred_region
      %1428 = vsyncadd [#allocation4], 0
      %s1430 = sshll.u32 [#allocation5], 4
      %s1431 = int_to_ptr.vmem [resolvable:$true] %s1430
      %s1432 = sshll.u32 %s6, 4
      %s1433 = int_to_ptr.hbm [resolvable:$true] %s1432
      %1435 = dma.vmem_to_hbm [thread:$0]  %s1431, 32, %s1433, [#allocation4]
    $region33: #{tpu_custom_call.1} parent=1 // pred_fallthru
      _
    // Predicated region
    $region34: #{tpu_custom_call.1} parent=1 // pred_check
      _
    $region35: #{tpu_custom_call.1} parent=1 // pred_check_branch
      %1437 = sbr.rel (0) target = $region37
    $region36: #{tpu_custom_call.1} parent=1 // pred_region
      %1439 = dma.done [#allocation4], 32
    $region37: #{tpu_custom_call.1} parent=1 // pred_fallthru
      _
    %1440 = vsyncpa [#allocation3], 1
    %1441 = vsyncpa [#allocation4], 1

</llo_original>
